<compile_context>
chip_gen: v7x
topology: tpu7x:2x2x1
jax: 0.10.0
libtpu: 0.0.40
codegen_flags: <defaults>
</compile_context>

<pallas_src>
import math

import jax
import jax.numpy as jnp
from jax.experimental import pallas as pl
from jax.experimental.pallas import tpu as pltpu


# ----------------------------- Pallas kernel -------------------------------- #
def _make_conv_kernel(K, Sh, Sw, tr, out_T, C):
    """Build the kernel body for fixed static geometry.

    Refs:
      xp_ref : (1, Sh*Sw, PS, PT, C)  bf16 phase-decomposed padded input (1 batch)
      w_ref  : (K*K, C, CP)           bf16 weights, resident across the grid
      b_ref  : (1, CP)                f32 bias, resident
      o_ref  : (1, tr*out_T, CP)      f32 output tile (lane-dense, CP % 128 == 0)
      acc_ref: (tr*out_T, CP)         f32 VMEM accumulator scratch
    """

    def kernel(xp_ref, w_ref, b_ref, o_ref, acc_ref):
        r = pl.program_id(1)
        row0 = r * tr
        acc_ref[...] = jnp.zeros_like(acc_ref)
        # K*K taps: each tap is a *contiguous* slice of a stride-phase plane,
        # so no strided VMEM access is needed inside the kernel.
        for kh in range(K):
            for kw in range(K):
                ph = (kh % Sh) * Sw + (kw % Sw)   # which phase plane
                dh = kh // Sh                     # static row offset in the plane
                dw = kw // Sw                     # static col offset in the plane
                tap = xp_ref[0, ph, pl.ds(row0 + dh, tr), pl.ds(dw, out_T), :]
                tap = tap.reshape(tr * out_T, C)
                acc_ref[...] += jnp.dot(
                    tap, w_ref[kh * K + kw],
                    preferred_element_type=jnp.float32)
        o_ref[0] = acc_ref[...] + b_ref[...]

    return kernel


def _pick_row_tile(out_S, out_T, target_rows=512):
    """Rows of output per grid step: aim for ~512 flattened patch rows per step,
    keep (tr*out_T) a multiple of 8 sublanes, and have tr divide out_S exactly."""
    t0 = min(out_S, max(1, target_rows // max(out_T, 1)))
    if t0 >= out_S:
        return out_S
    for tr in range(t0, 0, -1):
        if out_S % tr == 0 and (tr * out_T) % 8 == 0:
            return tr
    return out_S  # fall back to a single full-extent block per batch


def _pallas_downsample_conv(xp, w_mat, bias, *, K, Sh, Sw, tr, out_T, N, R, C, CP,
                            flops, bytes_accessed):
    PHW, PS, PT = xp.shape[1], xp.shape[2], xp.shape[3]
    M_blk = tr * out_T

    # Explicit VMEM budget (double-buffered input/output blocks + resident w/bias
    # + accumulator), clamped so it is valid on v5e/v6e (128 MiB) and v7x (64 MiB).
    xp_blk = PHW * PS * PT * C * 2
    o_blk = M_blk * CP * 4
    w_b = w_mat.size * 2
    acc_b = M_blk * CP * 4
    need = 2 * (xp_blk + o_blk + w_b + CP * 4) + acc_b
    vmem_limit = int(min(48 * 1024 * 1024, max(32 * 1024 * 1024, need + (8 << 20))))

    kernel = _make_conv_kernel(K, Sh, Sw, tr, out_T, C)
    return pl.pallas_call(
        kernel,
        out_shape=jax.ShapeDtypeStruct((N, R * M_blk, CP), jnp.float32),
        grid_spec=pltpu.PrefetchScalarGridSpec(
            num_scalar_prefetch=0,
            grid=(N, R),
            in_specs=[
                # full per-batch phase slab; index ignores r -> stays resident
                pl.BlockSpec((1, PHW, PS, PT, C), lambda n, r: (n, 0, 0, 0, 0)),
                pl.BlockSpec((K * K, C, CP), lambda n, r: (0, 0, 0)),
                pl.BlockSpec((1, CP), lambda n, r: (0, 0)),
            ],
            out_specs=pl.BlockSpec((1, M_blk, CP), lambda n, r: (n, r, 0)),
            scratch_shapes=[pltpu.VMEM((M_blk, CP), jnp.float32)],
        ),
        compiler_params=pltpu.CompilerParams(
            dimension_semantics=("parallel", "parallel"),
            vmem_limit_bytes=vmem_limit,
        ),
        cost_estimate=pl.CostEstimate(
            flops=flops, transcendentals=0, bytes_accessed=bytes_accessed),
    )(xp, w_mat, bias)


# ----------------------------- Module wrapper -------------------------------- #
class Downsample2D:
    """JAX/Pallas port of the PyTorch Downsample2D module."""

    def __init__(self, in_channels, conv_kernel_size, with_conv=True,
                 down_dim="both", key=None):
        assert conv_kernel_size in (3, 5)
        assert down_dim in ("both", "temporal", "spatial")
        self.with_conv = with_conv
        self.down_dim = down_dim
        self.in_channels = in_channels
        self.conv_kernel_size = conv_kernel_size
        if down_dim == "both":
            self.stride = (2, 2)
        elif down_dim == "temporal":
            self.stride = (1, 2)
        else:  # spatial
            self.stride = (2, 1)

        if self.with_conv:
            if key is None:
                key = jax.random.PRNGKey(0)
            kw_, kb_ = jax.random.split(key)
            K = conv_kernel_size
            fan_in = in_channels * K * K
            bound = 1.0 / math.sqrt(fan_in)
            # torch Conv2d layout: (C_out, C_in, K, K)
            self.weight = jax.random.uniform(
                kw_, (in_channels, in_channels, K, K),
                dtype=jnp.float32, minval=-bound, maxval=bound)
            self.bias = jax.random.uniform(
                kb_, (in_channels,), dtype=jnp.float32,
                minval=-bound, maxval=bound)

    def __call__(self, x):
        # x: (N, C, S, T) float32 (NCHW, same as PyTorch)
        if not self.with_conv:
            # TODO(synk): max-pool path kept in plain JAX (trivial strided reduce,
            # not the hot path).
            Sh, Sw = self.stride
            N, C, S, T = x.shape
            x = x[:, :, :(S // Sh) * Sh, :(T // Sw) * Sw]
            x = x.reshape(N, C, S // Sh, Sh, T // Sw, Sw)
            return jnp.max(x, axis=(3, 5))

        N, C, S, T = x.shape
        K = self.conv_kernel_size
        Sh, Sw = self.stride
        if self.down_dim == "both":
            out_S, out_T = S // 2, T // 2
        elif self.down_dim == "spatial":
            out_S, out_T = S // 2, T
        else:  # temporal
            out_S, out_T = S, T // 2

        pad_h = max((out_S - 1) * Sh + K - S, 0)
        pad_w = max((out_T - 1) * Sw + K - T, 0)

        # ---------- M tiling ----------
        tr = _pick_row_tile(out_S, out_T)
        R = out_S // tr
        dh_max = (K - 1) // Sh
        dw_max = (K - 1) // Sw
        PS = out_S + dh_max
        PT = out_T + dw_max
        CP = ((C + 127) // 128) * 128  # lane-dense output channels

        # ---------- glue (single fused XLA pass, ~1x input bytes) ----------
        # torch F.pad semantics: (w_left, w_right, h_top, h_bottom)
        x_pad = jnp.pad(
            x, ((0, 0), (0, 0),
                (pad_h // 2, pad_h - pad_h // 2),
                (pad_w // 2, pad_w - pad_w // 2)))
        x_nhwc = jnp.transpose(x_pad, (0, 2, 3, 1))  # (N, S', T', C)

        # crop-or-pad to (PS*Sh, PT*Sw); rows/cols beyond the conv's reach are unused
        S_cur, T_cur = S + pad_h, T + pad_w
        S_tgt, T_tgt = PS * Sh, PT * Sw
        x_nhwc = x_nhwc[:, :min(S_cur, S_tgt), :min(T_cur, T_tgt), :]
        x_nhwc = jnp.pad(x_nhwc, ((0, 0),
                                  (0, max(0, S_tgt - S_cur)),
                                  (0, max(0, T_tgt - T_cur)),
                                  (0, 0)))
        # stride-phase decomposition: xp[n, ph_h*Sw+ph_w, a, b, c]
        #   = x_padded[n, a*Sh + ph_h, b*Sw + ph_w, c]
        xp = x_nhwc.reshape(N, PS, Sh, PT, Sw, C)
        xp = jnp.transpose(xp, (0, 2, 4, 1, 3, 5)).reshape(N, Sh * Sw, PS, PT, C)
        xp = xp.astype(jnp.bfloat16)

        # weights (C_out, C_in, K, K) -> (K*K, C_in, CP) bf16; bias -> (1, CP) f32
        w_mat = jnp.transpose(self.weight, (2, 3, 1, 0)).reshape(K * K, C, C)
        w_mat = jnp.pad(w_mat, ((0, 0), (0, 0), (0, CP - C))).astype(jnp.bfloat16)
        bias = jnp.pad(self.bias, (0, CP - C)).reshape(1, CP).astype(jnp.float32)

        flops = 2 * N * out_S * out_T * K * K * C * C
        bytes_accessed = (xp.size * 2 + w_mat.size * 2 + bias.size * 4
                          + N * out_S * out_T * CP * 4)

        out_flat = _pallas_downsample_conv(
            xp, w_mat, bias, K=K, Sh=Sh, Sw=Sw, tr=tr, out_T=out_T,
            N=N, R=R, C=C, CP=CP, flops=flops, bytes_accessed=bytes_accessed)

        out = out_flat[:, :, :C].reshape(N, out_S, out_T, C)
        return jnp.transpose(out, (0, 3, 1, 2))  # back to NCHW


# ----------------------------------- main ------------------------------------ #
if __name__ == "__main__":
    key = jax.random.PRNGKey(0)
    kx, kp = jax.random.split(key)

    N, C, S, T = 2, 4, 16, 16
    x = jax.random.normal(kx, (N, C, S, T), dtype=jnp.float32)

    def reference(mod, x):
        # Reference conv on bf16-rounded operands (the kernel feeds the MXU bf16)
        # with f32 accumulation, so only summation order differs from the kernel.
        K = mod.conv_kernel_size
        Sh, Sw = mod.stride
        _, _, S_, T_ = x.shape
        if mod.down_dim == "both":
            oS, oT = S_ // 2, T_ // 2
        elif mod.down_dim == "spatial":
            oS, oT = S_ // 2, T_
        else:
            oS, oT = S_, T_ // 2
        pad_h = max((oS - 1) * Sh + K - S_, 0)
        pad_w = max((oT - 1) * Sw + K - T_, 0)
        xb = x.astype(jnp.bfloat16).astype(jnp.float32)
        wb = mod.weight.astype(jnp.bfloat16).astype(jnp.float32)
        y = jax.lax.conv_general_dilated(
            xb, wb, window_strides=(Sh, Sw),
            padding=[(pad_h // 2, pad_h - pad_h // 2),
                     (pad_w // 2, pad_w - pad_w // 2)],
            dimension_numbers=("NCHW", "OIHW", "NCHW"),
            precision=jax.lax.Precision.HIGHEST,
        )
        return y + mod.bias[None, :, None, None]

    for dd, oshape in [("both", (N, C, S // 2, T // 2)),
                       ("temporal", (N, C, S, T // 2))]:
        mod = Downsample2D(in_channels=C, conv_kernel_size=3,
                           with_conv=True, down_dim=dd, key=kp)
        y = jax.block_until_ready(mod(x))
        assert y.shape == oshape, (dd, y.shape)
        ref = reference(mod, x)
        err = float(jnp.max(jnp.abs(y - ref)))
        assert err < 5e-2, (dd, err)

    # max-pool (with_conv=False) path: shape sanity only (plain JAX).
    mp = Downsample2D(in_channels=C, conv_kernel_size=3,
                      with_conv=False, down_dim="both")
    yp = jax.block_until_ready(mp(x))
    assert yp.shape == (N, C, S // 2, T // 2), yp.shape

    print("KERNEL_OK")
</pallas_src>

<mosaic_0001>
module attributes {stable_mosaic.version = 11 : i64} {
  func.func @kernel(%arg0: i32, %arg1: i32, %arg2: memref<1x4x9x9x4xbf16, #tpu.memory_space<vmem>>, %arg3: memref<9x4x128xbf16, #tpu.memory_space<vmem>>, %arg4: memref<1x128xf32, #tpu.memory_space<vmem>>, %arg5: memref<1x64x128xf32, #tpu.memory_space<vmem>>, %arg6: memref<64x128xf32, #tpu.memory_space<vmem>>) attributes {dimension_semantics = [#tpu.dimension_semantics<parallel>, #tpu.dimension_semantics<parallel>], iteration_bounds = array<i64: 2, 1>, scalar_prefetch = 0 : i64, scratch_operands = 1 : i64, tpu.core_type = #tpu.core_type<tc>, window_params = [{transform_indices = @transform_0, window_bounds = array<i64: 1, 4, 9, 9, 4>}, {pipeline_mode = #tpu.pipeline_mode<synchronous>, transform_indices = @transform_1, window_bounds = array<i64: 9, 4, 128>}, {pipeline_mode = #tpu.pipeline_mode<synchronous>, transform_indices = @transform_2, window_bounds = array<i64: 1, 128>}, {transform_indices = @transform_3, window_bounds = array<i64: 1, 64, 128>}]} {
    %c8_i32 = arith.constant 8 : i32
    %0 = arith.muli %arg1, %c8_i32 : i32
    %cst = arith.constant 0.000000e+00 : f32
    %1 = vector.broadcast %cst : f32 to vector<64x128xf32>
    %c0 = arith.constant 0 : index
    %c0_0 = arith.constant 0 : index
    %2 = vector.load %arg6[%c0, %c0_0] : memref<64x128xf32, #tpu.memory_space<vmem>>, vector<64x128xf32>
    tpu.vector_store %arg6[%c0, %c0_0], %1 {strides = array<i32>} : memref<64x128xf32, #tpu.memory_space<vmem>>, vector<64x128xf32>,
    %c0_i32 = arith.constant 0 : i32
    %3 = arith.addi %0, %c0_i32 : i32
    %c0_1 = arith.constant 0 : index
    %c0_2 = arith.constant 0 : index
    %4 = arith.index_cast %3 : i32 to index
    %c0_3 = arith.constant 0 : index
    %c0_4 = arith.constant 0 : index
    %5 = vector.load %arg2[%c0_1, %c0_2, %4, %c0_3, %c0_4] : memref<1x4x9x9x4xbf16, #tpu.memory_space<vmem>>, vector<1x1x8x8x4xbf16>
    %6 = vector.shape_cast %5 : vector<1x1x8x8x4xbf16> to vector<8x8x4xbf16>
    %7 = vector.shape_cast %6 : vector<8x8x4xbf16> to vector<64x4xbf16>
    %c0_5 = arith.constant 0 : index
    %c0_6 = arith.constant 0 : index
    %8 = vector.load %arg6[%c0_5, %c0_6] : memref<64x128xf32, #tpu.memory_space<vmem>>, vector<64x128xf32>
    %c0_7 = arith.constant 0 : index
    %c0_8 = arith.constant 0 : index
    %c0_9 = arith.constant 0 : index
    %9 = vector.load %arg3[%c0_7, %c0_8, %c0_9] : memref<9x4x128xbf16, #tpu.memory_space<vmem>>, vector<1x4x128xbf16>
    %10 = vector.shape_cast %9 : vector<1x4x128xbf16> to vector<4x128xbf16>
    %cst_10 = arith.constant dense<0.000000e+00> : vector<64x128xf32>
    %11 = tpu.matmul %7, %10, %cst_10 {dimension_numbers = #tpu.dot_dimension_numbers<[1], [0], [0], [1], [0, 0, 1, 1], [], []>} : vector<64x4xbf16>, vector<4x128xbf16>, vector<64x128xf32> -> vector<64x128xf32>
    %12 = arith.addf %8, %11 : vector<64x128xf32>
    %c0_11 = arith.constant 0 : index
    %c0_12 = arith.constant 0 : index
    %13 = vector.load %arg6[%c0_11, %c0_12] : memref<64x128xf32, #tpu.memory_space<vmem>>, vector<64x128xf32>
    tpu.vector_store %arg6[%c0_11, %c0_12], %12 {strides = array<i32>} : memref<64x128xf32, #tpu.memory_space<vmem>>, vector<64x128xf32>,
    %c0_i32_13 = arith.constant 0 : i32
    %14 = arith.addi %0, %c0_i32_13 : i32
    %c0_14 = arith.constant 0 : index
    %c1 = arith.constant 1 : index
    %15 = arith.index_cast %14 : i32 to index
    %c0_15 = arith.constant 0 : index
    %c0_16 = arith.constant 0 : index
    %16 = vector.load %arg2[%c0_14, %c1, %15, %c0_15, %c0_16] : memref<1x4x9x9x4xbf16, #tpu.memory_space<vmem>>, vector<1x1x8x8x4xbf16>
    %17 = vector.shape_cast %16 : vector<1x1x8x8x4xbf16> to vector<8x8x4xbf16>
    %18 = vector.shape_cast %17 : vector<8x8x4xbf16> to vector<64x4xbf16>
    %c0_17 = arith.constant 0 : index
    %c0_18 = arith.constant 0 : index
    %19 = vector.load %arg6[%c0_17, %c0_18] : memref<64x128xf32, #tpu.memory_space<vmem>>, vector<64x128xf32>
    %c1_19 = arith.constant 1 : index
    %c0_20 = arith.constant 0 : index
    %c0_21 = arith.constant 0 : index
    %20 = vector.load %arg3[%c1_19, %c0_20, %c0_21] : memref<9x4x128xbf16, #tpu.memory_space<vmem>>, vector<1x4x128xbf16>
    %21 = vector.shape_cast %20 : vector<1x4x128xbf16> to vector<4x128xbf16>
    %cst_22 = arith.constant dense<0.000000e+00> : vector<64x128xf32>
    %22 = tpu.matmul %18, %21, %cst_22 {dimension_numbers = #tpu.dot_dimension_numbers<[1], [0], [0], [1], [0, 0, 1, 1], [], []>} : vector<64x4xbf16>, vector<4x128xbf16>, vector<64x128xf32> -> vector<64x128xf32>
    %23 = arith.addf %19, %22 : vector<64x128xf32>
    %c0_23 = arith.constant 0 : index
    %c0_24 = arith.constant 0 : index
    %24 = vector.load %arg6[%c0_23, %c0_24] : memref<64x128xf32, #tpu.memory_space<vmem>>, vector<64x128xf32>
    tpu.vector_store %arg6[%c0_23, %c0_24], %23 {strides = array<i32>} : memref<64x128xf32, #tpu.memory_space<vmem>>, vector<64x128xf32>,
    %c0_i32_25 = arith.constant 0 : i32
    %25 = arith.addi %0, %c0_i32_25 : i32
    %c0_26 = arith.constant 0 : index
    %c0_27 = arith.constant 0 : index
    %26 = arith.index_cast %25 : i32 to index
    %c1_28 = arith.constant 1 : index
    %c0_29 = arith.constant 0 : index
    %27 = vector.load %arg2[%c0_26, %c0_27, %26, %c1_28, %c0_29] : memref<1x4x9x9x4xbf16, #tpu.memory_space<vmem>>, vector<1x1x8x8x4xbf16>
    %28 = vector.shape_cast %27 : vector<1x1x8x8x4xbf16> to vector<8x8x4xbf16>
    %29 = vector.shape_cast %28 : vector<8x8x4xbf16> to vector<64x4xbf16>
    %c0_30 = arith.constant 0 : index
    %c0_31 = arith.constant 0 : index
    %30 = vector.load %arg6[%c0_30, %c0_31] : memref<64x128xf32, #tpu.memory_space<vmem>>, vector<64x128xf32>
    %c2 = arith.constant 2 : index
    %c0_32 = arith.constant 0 : index
    %c0_33 = arith.constant 0 : index
    %31 = vector.load %arg3[%c2, %c0_32, %c0_33] : memref<9x4x128xbf16, #tpu.memory_space<vmem>>, vector<1x4x128xbf16>
    %32 = vector.shape_cast %31 : vector<1x4x128xbf16> to vector<4x128xbf16>
    %cst_34 = arith.constant dense<0.000000e+00> : vector<64x128xf32>
    %33 = tpu.matmul %29, %32, %cst_34 {dimension_numbers = #tpu.dot_dimension_numbers<[1], [0], [0], [1], [0, 0, 1, 1], [], []>} : vector<64x4xbf16>, vector<4x128xbf16>, vector<64x128xf32> -> vector<64x128xf32>
    %34 = arith.addf %30, %33 : vector<64x128xf32>
    %c0_35 = arith.constant 0 : index
    %c0_36 = arith.constant 0 : index
    %35 = vector.load %arg6[%c0_35, %c0_36] : memref<64x128xf32, #tpu.memory_space<vmem>>, vector<64x128xf32>
    tpu.vector_store %arg6[%c0_35, %c0_36], %34 {strides = array<i32>} : memref<64x128xf32, #tpu.memory_space<vmem>>, vector<64x128xf32>,
    %c0_i32_37 = arith.constant 0 : i32
    %36 = arith.addi %0, %c0_i32_37 : i32
    %c0_38 = arith.constant 0 : index
    %c2_39 = arith.constant 2 : index
    %37 = arith.index_cast %36 : i32 to index
    %c0_40 = arith.constant 0 : index
    %c0_41 = arith.constant 0 : index
    %38 = vector.load %arg2[%c0_38, %c2_39, %37, %c0_40, %c0_41] : memref<1x4x9x9x4xbf16, #tpu.memory_space<vmem>>, vector<1x1x8x8x4xbf16>
    %39 = vector.shape_cast %38 : vector<1x1x8x8x4xbf16> to vector<8x8x4xbf16>
    %40 = vector.shape_cast %39 : vector<8x8x4xbf16> to vector<64x4xbf16>
    %c0_42 = arith.constant 0 : index
    %c0_43 = arith.constant 0 : index
    %41 = vector.load %arg6[%c0_42, %c0_43] : memref<64x128xf32, #tpu.memory_space<vmem>>, vector<64x128xf32>
    %c3 = arith.constant 3 : index
    %c0_44 = arith.constant 0 : index
    %c0_45 = arith.constant 0 : index
    %42 = vector.load %arg3[%c3, %c0_44, %c0_45] : memref<9x4x128xbf16, #tpu.memory_space<vmem>>, vector<1x4x128xbf16>
    %43 = vector.shape_cast %42 : vector<1x4x128xbf16> to vector<4x128xbf16>
    %cst_46 = arith.constant dense<0.000000e+00> : vector<64x128xf32>
    %44 = tpu.matmul %40, %43, %cst_46 {dimension_numbers = #tpu.dot_dimension_numbers<[1], [0], [0], [1], [0, 0, 1, 1], [], []>} : vector<64x4xbf16>, vector<4x128xbf16>, vector<64x128xf32> -> vector<64x128xf32>
    %45 = arith.addf %41, %44 : vector<64x128xf32>
    %c0_47 = arith.constant 0 : index
    %c0_48 = arith.constant 0 : index
    %46 = vector.load %arg6[%c0_47, %c0_48] : memref<64x128xf32, #tpu.memory_space<vmem>>, vector<64x128xf32>
    tpu.vector_store %arg6[%c0_47, %c0_48], %45 {strides = array<i32>} : memref<64x128xf32, #tpu.memory_space<vmem>>, vector<64x128xf32>,
    %c0_i32_49 = arith.constant 0 : i32
    %47 = arith.addi %0, %c0_i32_49 : i32
    %c0_50 = arith.constant 0 : index
    %c3_51 = arith.constant 3 : index
    %48 = arith.index_cast %47 : i32 to index
    %c0_52 = arith.constant 0 : index
    %c0_53 = arith.constant 0 : index
    %49 = vector.load %arg2[%c0_50, %c3_51, %48, %c0_52, %c0_53] : memref<1x4x9x9x4xbf16, #tpu.memory_space<vmem>>, vector<1x1x8x8x4xbf16>
    %50 = vector.shape_cast %49 : vector<1x1x8x8x4xbf16> to vector<8x8x4xbf16>
    %51 = vector.shape_cast %50 : vector<8x8x4xbf16> to vector<64x4xbf16>
    %c0_54 = arith.constant 0 : index
    %c0_55 = arith.constant 0 : index
    %52 = vector.load %arg6[%c0_54, %c0_55] : memref<64x128xf32, #tpu.memory_space<vmem>>, vector<64x128xf32>
    %c4 = arith.constant 4 : index
    %c0_56 = arith.constant 0 : index
    %c0_57 = arith.constant 0 : index
    %53 = vector.load %arg3[%c4, %c0_56, %c0_57] : memref<9x4x128xbf16, #tpu.memory_space<vmem>>, vector<1x4x128xbf16>
    %54 = vector.shape_cast %53 : vector<1x4x128xbf16> to vector<4x128xbf16>
    %cst_58 = arith.constant dense<0.000000e+00> : vector<64x128xf32>
    %55 = tpu.matmul %51, %54, %cst_58 {dimension_numbers = #tpu.dot_dimension_numbers<[1], [0], [0], [1], [0, 0, 1, 1], [], []>} : vector<64x4xbf16>, vector<4x128xbf16>, vector<64x128xf32> -> vector<64x128xf32>
    %56 = arith.addf %52, %55 : vector<64x128xf32>
    %c0_59 = arith.constant 0 : index
    %c0_60 = arith.constant 0 : index
    %57 = vector.load %arg6[%c0_59, %c0_60] : memref<64x128xf32, #tpu.memory_space<vmem>>, vector<64x128xf32>
    tpu.vector_store %arg6[%c0_59, %c0_60], %56 {strides = array<i32>} : memref<64x128xf32, #tpu.memory_space<vmem>>, vector<64x128xf32>,
    %c0_i32_61 = arith.constant 0 : i32
    %58 = arith.addi %0, %c0_i32_61 : i32
    %c0_62 = arith.constant 0 : index
    %c2_63 = arith.constant 2 : index
    %59 = arith.index_cast %58 : i32 to index
    %c1_64 = arith.constant 1 : index
    %c0_65 = arith.constant 0 : index
    %60 = vector.load %arg2[%c0_62, %c2_63, %59, %c1_64, %c0_65] : memref<1x4x9x9x4xbf16, #tpu.memory_space<vmem>>, vector<1x1x8x8x4xbf16>
    %61 = vector.shape_cast %60 : vector<1x1x8x8x4xbf16> to vector<8x8x4xbf16>
    %62 = vector.shape_cast %61 : vector<8x8x4xbf16> to vector<64x4xbf16>
    %c0_66 = arith.constant 0 : index
    %c0_67 = arith.constant 0 : index
    %63 = vector.load %arg6[%c0_66, %c0_67] : memref<64x128xf32, #tpu.memory_space<vmem>>, vector<64x128xf32>
    %c5 = arith.constant 5 : index
    %c0_68 = arith.constant 0 : index
    %c0_69 = arith.constant 0 : index
    %64 = vector.load %arg3[%c5, %c0_68, %c0_69] : memref<9x4x128xbf16, #tpu.memory_space<vmem>>, vector<1x4x128xbf16>
    %65 = vector.shape_cast %64 : vector<1x4x128xbf16> to vector<4x128xbf16>
    %cst_70 = arith.constant dense<0.000000e+00> : vector<64x128xf32>
    %66 = tpu.matmul %62, %65, %cst_70 {dimension_numbers = #tpu.dot_dimension_numbers<[1], [0], [0], [1], [0, 0, 1, 1], [], []>} : vector<64x4xbf16>, vector<4x128xbf16>, vector<64x128xf32> -> vector<64x128xf32>
    %67 = arith.addf %63, %66 : vector<64x128xf32>
    %c0_71 = arith.constant 0 : index
    %c0_72 = arith.constant 0 : index
    %68 = vector.load %arg6[%c0_71, %c0_72] : memref<64x128xf32, #tpu.memory_space<vmem>>, vector<64x128xf32>
    tpu.vector_store %arg6[%c0_71, %c0_72], %67 {strides = array<i32>} : memref<64x128xf32, #tpu.memory_space<vmem>>, vector<64x128xf32>,
    %c1_i32 = arith.constant 1 : i32
    %69 = arith.addi %0, %c1_i32 : i32
    %c0_73 = arith.constant 0 : index
    %c0_74 = arith.constant 0 : index
    %70 = arith.index_cast %69 : i32 to index
    %c0_75 = arith.constant 0 : index
    %c0_76 = arith.constant 0 : index
    %71 = vector.load %arg2[%c0_73, %c0_74, %70, %c0_75, %c0_76] : memref<1x4x9x9x4xbf16, #tpu.memory_space<vmem>>, vector<1x1x8x8x4xbf16>
    %72 = vector.shape_cast %71 : vector<1x1x8x8x4xbf16> to vector<8x8x4xbf16>
    %73 = vector.shape_cast %72 : vector<8x8x4xbf16> to vector<64x4xbf16>
    %c0_77 = arith.constant 0 : index
    %c0_78 = arith.constant 0 : index
    %74 = vector.load %arg6[%c0_77, %c0_78] : memref<64x128xf32, #tpu.memory_space<vmem>>, vector<64x128xf32>
    %c6 = arith.constant 6 : index
    %c0_79 = arith.constant 0 : index
    %c0_80 = arith.constant 0 : index
    %75 = vector.load %arg3[%c6, %c0_79, %c0_80] : memref<9x4x128xbf16, #tpu.memory_space<vmem>>, vector<1x4x128xbf16>
    %76 = vector.shape_cast %75 : vector<1x4x128xbf16> to vector<4x128xbf16>
    %cst_81 = arith.constant dense<0.000000e+00> : vector<64x128xf32>
    %77 = tpu.matmul %73, %76, %cst_81 {dimension_numbers = #tpu.dot_dimension_numbers<[1], [0], [0], [1], [0, 0, 1, 1], [], []>} : vector<64x4xbf16>, vector<4x128xbf16>, vector<64x128xf32> -> vector<64x128xf32>
    %78 = arith.addf %74, %77 : vector<64x128xf32>
    %c0_82 = arith.constant 0 : index
    %c0_83 = arith.constant 0 : index
    %79 = vector.load %arg6[%c0_82, %c0_83] : memref<64x128xf32, #tpu.memory_space<vmem>>, vector<64x128xf32>
    tpu.vector_store %arg6[%c0_82, %c0_83], %78 {strides = array<i32>} : memref<64x128xf32, #tpu.memory_space<vmem>>, vector<64x128xf32>,
    %c1_i32_84 = arith.constant 1 : i32
    %80 = arith.addi %0, %c1_i32_84 : i32
    %c0_85 = arith.constant 0 : index
    %c1_86 = arith.constant 1 : index
    %81 = arith.index_cast %80 : i32 to index
    %c0_87 = arith.constant 0 : index
    %c0_88 = arith.constant 0 : index
    %82 = vector.load %arg2[%c0_85, %c1_86, %81, %c0_87, %c0_88] : memref<1x4x9x9x4xbf16, #tpu.memory_space<vmem>>, vector<1x1x8x8x4xbf16>
    %83 = vector.shape_cast %82 : vector<1x1x8x8x4xbf16> to vector<8x8x4xbf16>
    %84 = vector.shape_cast %83 : vector<8x8x4xbf16> to vector<64x4xbf16>
    %c0_89 = arith.constant 0 : index
    %c0_90 = arith.constant 0 : index
    %85 = vector.load %arg6[%c0_89, %c0_90] : memref<64x128xf32, #tpu.memory_space<vmem>>, vector<64x128xf32>
    %c7 = arith.constant 7 : index
    %c0_91 = arith.constant 0 : index
    %c0_92 = arith.constant 0 : index
    %86 = vector.load %arg3[%c7, %c0_91, %c0_92] : memref<9x4x128xbf16, #tpu.memory_space<vmem>>, vector<1x4x128xbf16>
    %87 = vector.shape_cast %86 : vector<1x4x128xbf16> to vector<4x128xbf16>
    %cst_93 = arith.constant dense<0.000000e+00> : vector<64x128xf32>
    %88 = tpu.matmul %84, %87, %cst_93 {dimension_numbers = #tpu.dot_dimension_numbers<[1], [0], [0], [1], [0, 0, 1, 1], [], []>} : vector<64x4xbf16>, vector<4x128xbf16>, vector<64x128xf32> -> vector<64x128xf32>
    %89 = arith.addf %85, %88 : vector<64x128xf32>
    %c0_94 = arith.constant 0 : index
    %c0_95 = arith.constant 0 : index
    %90 = vector.load %arg6[%c0_94, %c0_95] : memref<64x128xf32, #tpu.memory_space<vmem>>, vector<64x128xf32>
    tpu.vector_store %arg6[%c0_94, %c0_95], %89 {strides = array<i32>} : memref<64x128xf32, #tpu.memory_space<vmem>>, vector<64x128xf32>,
    %c1_i32_96 = arith.constant 1 : i32
    %91 = arith.addi %0, %c1_i32_96 : i32
    %c0_97 = arith.constant 0 : index
    %c0_98 = arith.constant 0 : index
    %92 = arith.index_cast %91 : i32 to index
    %c1_99 = arith.constant 1 : index
    %c0_100 = arith.constant 0 : index
    %93 = vector.load %arg2[%c0_97, %c0_98, %92, %c1_99, %c0_100] : memref<1x4x9x9x4xbf16, #tpu.memory_space<vmem>>, vector<1x1x8x8x4xbf16>
    %94 = vector.shape_cast %93 : vector<1x1x8x8x4xbf16> to vector<8x8x4xbf16>
    %95 = vector.shape_cast %94 : vector<8x8x4xbf16> to vector<64x4xbf16>
    %c0_101 = arith.constant 0 : index
    %c0_102 = arith.constant 0 : index
    %96 = vector.load %arg6[%c0_101, %c0_102] : memref<64x128xf32, #tpu.memory_space<vmem>>, vector<64x128xf32>
    %c8 = arith.constant 8 : index
    %c0_103 = arith.constant 0 : index
    %c0_104 = arith.constant 0 : index
    %97 = vector.load %arg3[%c8, %c0_103, %c0_104] : memref<9x4x128xbf16, #tpu.memory_space<vmem>>, vector<1x4x128xbf16>
    %98 = vector.shape_cast %97 : vector<1x4x128xbf16> to vector<4x128xbf16>
    %cst_105 = arith.constant dense<0.000000e+00> : vector<64x128xf32>
    %99 = tpu.matmul %95, %98, %cst_105 {dimension_numbers = #tpu.dot_dimension_numbers<[1], [0], [0], [1], [0, 0, 1, 1], [], []>} : vector<64x4xbf16>, vector<4x128xbf16>, vector<64x128xf32> -> vector<64x128xf32>
    %100 = arith.addf %96, %99 : vector<64x128xf32>
    %c0_106 = arith.constant 0 : index
    %c0_107 = arith.constant 0 : index
    %101 = vector.load %arg6[%c0_106, %c0_107] : memref<64x128xf32, #tpu.memory_space<vmem>>, vector<64x128xf32>
    tpu.vector_store %arg6[%c0_106, %c0_107], %100 {strides = array<i32>} : memref<64x128xf32, #tpu.memory_space<vmem>>, vector<64x128xf32>,
    %c0_108 = arith.constant 0 : index
    %c0_109 = arith.constant 0 : index
    %102 = vector.load %arg6[%c0_108, %c0_109] : memref<64x128xf32, #tpu.memory_space<vmem>>, vector<64x128xf32>
    %c0_110 = arith.constant 0 : index
    %c0_111 = arith.constant 0 : index
    %103 = vector.load %arg4[%c0_110, %c0_111] : memref<1x128xf32, #tpu.memory_space<vmem>>, vector<1x128xf32>
    %104 = vector.broadcast %103 : vector<1x128xf32> to vector<64x128xf32>
    %105 = arith.addf %102, %104 : vector<64x128xf32>
    %c0_112 = arith.constant 0 : index
    %c0_113 = arith.constant 0 : index
    %c0_114 = arith.constant 0 : index
    %106 = vector.load %arg5[%c0_112, %c0_113, %c0_114] : memref<1x64x128xf32, #tpu.memory_space<vmem>>, vector<1x64x128xf32>
    %107 = vector.shape_cast %106 : vector<1x64x128xf32> to vector<64x128xf32>
    %108 = vector.shape_cast %105 : vector<64x128xf32> to vector<1x64x128xf32>
    tpu.vector_store %arg5[%c0_112, %c0_113, %c0_114], %108 {strides = array<i32>} : memref<1x64x128xf32, #tpu.memory_space<vmem>>, vector<1x64x128xf32>,
    return
  }
  func.func @transform_0(%arg0: i32, %arg1: i32) -> (i32, i32, i32, i32, i32) {
    %c0_i32 = arith.constant 0 : i32
    %c0_i32_0 = arith.constant 0 : i32
    %c0_i32_1 = arith.constant 0 : i32
    %c0_i32_2 = arith.constant 0 : i32
    %c0_i32_3 = arith.constant 0 : i32
    return %arg0, %c0_i32, %c0_i32_0, %c0_i32_1, %c0_i32_2 : i32, i32, i32, i32, i32
  }
  func.func @transform_1(%arg0: i32, %arg1: i32) -> (i32, i32, i32) {
    %c0_i32 = arith.constant 0 : i32
    %c0_i32_0 = arith.constant 0 : i32
    %c0_i32_1 = arith.constant 0 : i32
    %c0_i32_2 = arith.constant 0 : i32
    return %c0_i32, %c0_i32_0, %c0_i32_1 : i32, i32, i32
  }
  func.func @transform_2(%arg0: i32, %arg1: i32) -> (i32, i32) {
    %c0_i32 = arith.constant 0 : i32
    %c0_i32_0 = arith.constant 0 : i32
    %c0_i32_1 = arith.constant 0 : i32
    return %c0_i32, %c0_i32_0 : i32, i32
  }
  func.func @transform_3(%arg0: i32, %arg1: i32) -> (i32, i32, i32) {
    %c0_i32 = arith.constant 0 : i32
    %c0_i32_0 = arith.constant 0 : i32
    return %arg0, %arg1, %c0_i32 : i32, i32, i32
  }
}

</mosaic_0001>

<llo_original>
// kernel: tpu_custom_call.1
$region0: #{tpu_custom_call.1}
  #allocation0 [shape = 'u32[]', space=smem, size = 0x4, offset = 0x4, fixed_abs, tag = 'smem constant byte address 0x4 - core index']
  #allocation1 [shape = 'u32[144,128]{1,0:T(1,128)}', space=vmem, size = 0x12000, scoped, tag = 'internal scratch']
  #allocation2 [shape = 'f32[64,128]{1,0:T(8,128)}', space=vmem, size = 0x8000, scoped, tag = 'scratch operand']
  %s0 = inlined_call_operand.vmem [shape: bf16[2,4,9,9,4], index: 0, kind: input, shape index: {}]
  %s1 = inlined_call_operand.vmem [shape: bf16[9,4,128], index: 1, kind: input, shape index: {}]
  %s2 = inlined_call_operand.vmem [shape: f32[1,128], index: 2, kind: input, shape index: {}]
  %s3 = inlined_call_operand.hbm [shape: f32[2,64,128], index: 3, kind: output, shape index: {}]
  %s4 = sld [smem:[#allocation0]]
  $region45: #{tpu_custom_call.1} parent=0
    _
  %s6 = ssub.s32 1, %s4
  %s7 = scalar_select 0, %s6, %s4
  $region1: #{tpu_custom_call.1} parent=0
    #allocation3 [shape = 'u8[65536]{0}', space=vmem, size = 0x10000, scoped, tag = 'output window, operand 0']
    #allocation4 [shape = 's32[2]{0}', space=sflag, size = 0x8, scoped, tag = 'scoped memory for tpu_custom_call.1']
    %8 = vsyncpa [#allocation4], 0
    %s9 = scalar_lea.sflag [#allocation4], 1
    %10 = vsyncpa %s9, 0
    loop: start=0, step=1, limit=4
    $region2: #{tpu_custom_call.1} parent=1 // loop_pre_header
      _
    $region3: #{tpu_custom_call.1} parent=1 // loop_header
      %s12 = sphi 0, %s16
      %p13 = scmp.ge.s32.totalorder %s12, 4
      %s19 = sphi 0, %s31
      %s20 = sphi 0, %s27
      %s21 = sphi 0, %s19
      %s22 = sphi 0, %s20
      %s23 = sphi 0, %s21
      %s24 = sphi 0, %s22
      %s34 = sphi 0, %s36
      %s37 = sphi 0, %s34
      %s38 = sphi 0, %s37
      %s54 = sphi 0, %s38
      %s58 = sphi 0, %s58
      %s60 = sphi 0, %s58
      %s61 = sphi 0, %s60
      %s75 = sphi 0, %s61
      %s79 = sphi 0, %s79
      %s81 = sphi 0, %s79
      %s82 = sphi 0, %s81
      %s96 = sphi 0, %s82
      %s104 = sphi 0, %s106
      %s107 = sphi 0, %s104
      %s108 = sphi 0, %s107
      %s124 = sphi 0, %s108
    $region4: #{tpu_custom_call.1} parent=1 // loop_header_branch
      %15 = sbr.rel (%p13) target = $region8
    $region5: #{tpu_custom_call.1} parent=1 // loop_body
      %s17 = ssub.s32 %s12, 1
      %s18 = ssub.s32 %s12, 2
      %s25 = sadd.s32 1, %s20
      %p26 = scmp.ge.s32.totalorder %s25, 1
      %s27 = scalar_select %p26, 0, %s25
      %s28 = sadd.s32 1, %s19
      %s29 = scalar_select %p26, %s28, %s19
      %p30 = scmp.ge.s32.totalorder %s29, 2
      %s31 = scalar_select %p30, 0, %s29
      %s32 = ssub.s32 %s19, %s31
      %p33 = scmp.eq.s32.totalorder %s32, 0
      %s35 = sadd.s32 %s34, 1
      %s36 = scalar_select %p33, %s34, %s35
      %p39 = pneg %p33
      %p40 = scmp.eq.s32.totalorder %s12, 1
      %p41 = por %p39, %p40
      %p42 = scmp.ne.s32.totalorder %s34, %s37
      %p43 = scmp.eq.s32.totalorder %s12, 0
      %p44 = por %p42, %p43
      %p45 = scmp.ne.s32.totalorder %s34, %s37
      %p46 = scmp.eq.s32.totalorder %s17, 1
      %p47 = por %p45, %p46
      %p48 = scmp.ne.s32.totalorder %s37, %s38
      %p49 = scmp.eq.s32.totalorder %s17, 0
      %p50 = por %p48, %p49
      %p51 = scmp.ne.s32.totalorder %s37, %s38
      %p52 = scmp.eq.s32.totalorder %s18, 1
      %p53 = por %p51, %p52
      %p55 = scmp.ne.s32.totalorder %s38, %s54
      %p56 = scmp.eq.s32.totalorder %s18, 0
      %p57 = por %p55, %p56
      %s59 = sadd.s32 %s58, 1
      %p62 = scmp.eq.s32.totalorder %s12, 1
      %p63 = scmp.ne.s32.totalorder %s58, %s60
      %p64 = scmp.eq.s32.totalorder %s12, 0
      %p65 = por %p63, %p64
      %p66 = scmp.ne.s32.totalorder %s58, %s60
      %p67 = scmp.eq.s32.totalorder %s17, 1
      %p68 = por %p66, %p67
      %p69 = scmp.ne.s32.totalorder %s60, %s61
      %p70 = scmp.eq.s32.totalorder %s17, 0
      %p71 = por %p69, %p70
      %p72 = scmp.ne.s32.totalorder %s60, %s61
      %p73 = scmp.eq.s32.totalorder %s18, 1
      %p74 = por %p72, %p73
      %p76 = scmp.ne.s32.totalorder %s61, %s75
      %p77 = scmp.eq.s32.totalorder %s18, 0
      %p78 = por %p76, %p77
      %s80 = sadd.s32 %s79, 1
      %p83 = scmp.eq.s32.totalorder %s12, 1
      %p84 = scmp.ne.s32.totalorder %s79, %s81
      %p85 = scmp.eq.s32.totalorder %s12, 0
      %p86 = por %p84, %p85
      %p87 = scmp.ne.s32.totalorder %s79, %s81
      %p88 = scmp.eq.s32.totalorder %s17, 1
      %p89 = por %p87, %p88
      %p90 = scmp.ne.s32.totalorder %s81, %s82
      %p91 = scmp.eq.s32.totalorder %s17, 0
      %p92 = por %p90, %p91
      %p93 = scmp.ne.s32.totalorder %s81, %s82
      %p94 = scmp.eq.s32.totalorder %s18, 1
      %p95 = por %p93, %p94
      %p97 = scmp.ne.s32.totalorder %s82, %s96
      %p98 = scmp.eq.s32.totalorder %s18, 0
      %p99 = por %p97, %p98
      %s100 = ssub.s32 %s19, %s31
      %s101 = ssub.s32 %s20, %s27
      %s102 = sor.u32 %s100, %s101
      %p103 = scmp.eq.s32.totalorder %s102, 0
      %s105 = sadd.s32 %s104, 1
      %s106 = scalar_select %p103, %s104, %s105
      %p109 = pneg %p103
      %p110 = scmp.eq.s32.totalorder %s12, 1
      %p111 = por %p109, %p110
      %p112 = scmp.ne.s32.totalorder %s104, %s107
      %p113 = scmp.eq.s32.totalorder %s12, 0
      %p114 = por %p112, %p113
      %p115 = scmp.ne.s32.totalorder %s104, %s107
      %p116 = scmp.eq.s32.totalorder %s17, 1
      %p117 = por %p115, %p116
      %p118 = scmp.ne.s32.totalorder %s107, %s108
      %p119 = scmp.eq.s32.totalorder %s17, 0
      %p120 = por %p118, %p119
      %p121 = scmp.ne.s32.totalorder %s107, %s108
      %p122 = scmp.eq.s32.totalorder %s18, 1
      %p123 = por %p121, %p122
      %p125 = scmp.ne.s32.totalorder %s108, %s124
      %p126 = scmp.eq.s32.totalorder %s18, 0
      %p127 = por %p125, %p126
      %p128 = scmp.le.s32.totalorder 1, %s12
      %p129 = scmp.lt.s32.totalorder %s12, 3
      %p130 = pnand %p128, %p129
      %p131 = pneg %p130
      // Predicated region
      $region9: #{tpu_custom_call.1} parent=5 // pred_check
        _
      $region10: #{tpu_custom_call.1} parent=5 // pred_check_branch
        %133 = sbr.rel (%p130) target = $region12
      $region11: #{tpu_custom_call.1} parent=5 // pred_region
        %s134 = ssub.s32 %s12, 1
        // Predicated region
        $region13: #{tpu_custom_call.1} parent=11 // pred_check
          %p135 = pneg %p71
        $region14: #{tpu_custom_call.1} parent=11 // pred_check_branch
          %137 = sbr.rel (%p135) target = $region16
        $region15: #{tpu_custom_call.1} parent=11 // pred_region
          _
        $region16: #{tpu_custom_call.1} parent=11 // pred_fallthru
          _
        // Predicated region
        $region17: #{tpu_custom_call.1} parent=11 // pred_check
          %p138 = pneg %p92
        $region18: #{tpu_custom_call.1} parent=11 // pred_check_branch
          %140 = sbr.rel (%p138) target = $region20
        $region19: #{tpu_custom_call.1} parent=11 // pred_region
          _
        $region20: #{tpu_custom_call.1} parent=11 // pred_fallthru
          _
      $region12: #{tpu_custom_call.1} parent=5 // pred_fallthru
        _
      %p141 = scmp.lt.s32.totalorder %s12, 2
      // Predicated region
      $region21: #{tpu_custom_call.1} parent=5 // pred_check
        %p142 = pneg %p141
      $region22: #{tpu_custom_call.1} parent=5 // pred_check_branch
        %144 = sbr.rel (%p142) target = $region24
      $region23: #{tpu_custom_call.1} parent=5 // pred_region
        // Predicated region
        $region25: #{tpu_custom_call.1} parent=23 // pred_check
          %p145 = pneg %p44
        $region26: #{tpu_custom_call.1} parent=23 // pred_check_branch
          %147 = sbr.rel (%p145) target = $region28
        $region27: #{tpu_custom_call.1} parent=23 // pred_region
          %p148 = scmp.lt.s32.totalorder %s19, 1
          %s149 = scalar_select %p148, %s19, 1
          %s150 = smul.addr %s149, 72
          %s151 = smul.addr %s150, 4
          %s152 = scalar_lea.vmem %s0, %s151
        $region28: #{tpu_custom_call.1} parent=23 // pred_fallthru
          _
      $region24: #{tpu_custom_call.1} parent=5 // pred_fallthru
        _
      %p153 = scmp.le.s32.totalorder 1, %s12
      %p154 = scmp.lt.s32.totalorder %s12, 3
      %p155 = pnand %p153, %p154
      %p156 = pneg %p155
      // Predicated region
      $region29: #{tpu_custom_call.1} parent=5 // pred_check
        _
      $region30: #{tpu_custom_call.1} parent=5 // pred_check_branch
        %158 = sbr.rel (%p155) target = $region32
      $region31: #{tpu_custom_call.1} parent=5 // pred_region
        %s159 = ssub.s32 %s12, 1
        %p160 = scmp.lt.s32.totalorder %s21, 1
        %s161 = scalar_select %p160, %s21, 1
        %s162 = smul.addr %s161, 72
        %s163 = smul.addr %s162, 4
        %s164 = scalar_lea.vmem %s0, %s163
        %p165 = pneg %p50
        %p166 = pneg %p47
        %p167 = pneg %p71
        %p168 = pneg %p68
        %p169 = pneg %p92
        %p170 = pneg %p89
        %p171 = pneg %p120
        %p172 = pneg %p117
        %s173 = sand.u32 %s107, 1
        %s174 = scalar_lea.sflag [#allocation4], %s173
        %s175 = sand.u32 %s107, 1
        %s176 = smul.addr %s175, 64
        %s177 = scalar_lea.vmem [#allocation3], %s176
        %p178 = scmp.lt.s32.totalorder %s21, 1
        %s179 = scalar_select %p178, %s21, 1
        %s180 = smul.addr %s179, 72
        %s181 = smul.addr %s180, 4
        %s182 = scalar_lea.vmem %s0, %s181
        %s183 = smul.u32 8, %s22
        %s185 = smul.u32 %s22, 8
        %186 = vst [vmem:[#allocation2] sm:$0xff] 0.0
        %187 = vst [vmem:[#allocation2 + $0x8] sm:$0xff] 0.0
        %188 = vst [vmem:[#allocation2 + $0x10] sm:$0xff] 0.0
        %189 = vst [vmem:[#allocation2 + $0x18] sm:$0xff] 0.0
        %190 = vst [vmem:[#allocation2 + $0x20] sm:$0xff] 0.0
        %191 = vst [vmem:[#allocation2 + $0x28] sm:$0xff] 0.0
        %192 = vst [vmem:[#allocation2 + $0x30] sm:$0xff] 0.0
        %193 = vst [vmem:[#allocation2 + $0x38] sm:$0xff] 0.0
        %s194 = smul.u32 %s185, 2
        %s195 = smul.addr %s194, 4
        %s196 = scalar_lea.vmem %s182, %s195
        %v197 = vld [vmem:[%s196] sm:$0xf]
        %v198 = vld [vmem:[%s196 + $0x8] sm:$0xf]
        %v199 = vld [vmem:[%s196 + $0x10] sm:$0xf]
        %v200 = vld [vmem:[%s196 + $0x18] sm:$0xf]
        %v201 = vld [vmem:[%s196 + $0x20] sm:$0xf]
        %v202 = vld [vmem:[%s196 + $0x28] sm:$0xf]
        %v203 = vld [vmem:[%s196 + $0x30] sm:$0xf]
        %v204 = vld [vmem:[%s196 + $0x38] sm:$0xf]
        %v205 = vld [vmem:[#allocation2] sm:$0xff]
        %v206 = vld [vmem:[#allocation2 + $0x8] sm:$0xff]
        %v207 = vld [vmem:[#allocation2 + $0x10] sm:$0xff]
        %v208 = vld [vmem:[#allocation2 + $0x18] sm:$0xff]
        %v209 = vld [vmem:[#allocation2 + $0x20] sm:$0xff]
        %v210 = vld [vmem:[#allocation2 + $0x28] sm:$0xff]
        %v211 = vld [vmem:[#allocation2 + $0x30] sm:$0xff]
        %v212 = vld [vmem:[#allocation2 + $0x38] sm:$0xff]
        %v213 = vld [vmem:[%s1] sm:$0x3]
        %v222 = vunpack.c.l.b16 %v197
        %v223 = vunpack.c.l.b16 %v198
        %v224 = vunpack.c.l.b16 %v199
        %v225 = vunpack.c.l.b16 %v200
        %v226 = vunpack.c.l.b16 %v201
        %v227 = vunpack.c.l.b16 %v202
        %v228 = vunpack.c.l.b16 %v203
        %v229 = vunpack.c.l.b16 %v204
        %v230 = vpack.c.b16 %v223, %v222
        %v231 = vpack.c.b16 %v225, %v224
        %v232 = vpack.c.b16 %v227, %v226
        %v233 = vpack.c.b16 %v229, %v228
        %vm234 = vcmask 31744
        %v236 = vsel %vm234, %v230, 0
        %v239 = vsel %vm234, %v231, 0
        %v242 = vsel %vm234, %v232, 0
        %v245 = vsel %vm234, %v233, 0
        %vm247 = vcmask 1041408
        %v249 = vsel %vm247, %v213, 0
        %251 = vmatprep.subr.bf16.mxu0 0
        %252 = vmatpush1.bf16.msra.mxu0 %v249
        %253 = vmatprep.subr.bf16.mxu0 0
        %254 = vmatpush1.bf16.msra.mxu0 0
        %255 = vmatprep.subr.bf16.mxu0 0
        %256 = vmatpush1.bf16.msra.mxu0 0
        %257 = vmatprep.subr.bf16.mxu0 0
        %258 = vmatpush1.bf16.msra.mxu0 0
        %259 = vmatprep.subr.bf16.mxu0 0
        %260 = vmatpush1.bf16.msra.mxu0 0
        %261 = vmatprep.subr.bf16.mxu0 0
        %262 = vmatpush1.bf16.msra.mxu0 0
        %263 = vmatprep.subr.bf16.mxu0 0
        %264 = vmatpush1.bf16.msra.mxu0 0
        %265 = vmatprep.subr.bf16.mxu0 0
        %266 = vmatpush1.bf16.msra.mxu0 0
        %267 = vmatprep.subr.bf16.mxu0 0
        %268 = vmatpush1.bf16.msra.mxu0 0
        %269 = vmatprep.subr.bf16.mxu0 0
        %270 = vmatpush1.bf16.msra.mxu0 0
        %271 = vmatprep.subr.bf16.mxu0 0
        %272 = vmatpush1.bf16.msra.mxu0 0
        %273 = vmatprep.subr.bf16.mxu0 0
        %274 = vmatpush1.bf16.msra.mxu0 0
        %275 = vmatprep.subr.bf16.mxu0 0
        %276 = vmatpush1.bf16.msra.mxu0 0
        %277 = vmatprep.subr.bf16.mxu0 0
        %278 = vmatpush1.bf16.msra.mxu0 0
        %279 = vmatprep.subr.bf16.mxu0 0
        %280 = vmatpush1.bf16.msra.mxu0 0
        %281 = vmatprep.subr.bf16.mxu0 0
        %282 = vmatpush1.bf16.msra.mxu0 0
        %283 = vmatprep.mubr.bf16.mxu0 0
        %284 = vmatmul.mubr.bf16.gmra.mrb[0].mxu0 %v236
        %v285 = vpop.f32.mrb[0].mxu0
        %v286 = vadd.f32 0.0, %v285
        %v287 = vpop.f32.mrb[0].mxu0
        %v288 = vpop.f32.mrb[0].mxu0
        %v289 = vadd.f32 0.0, %v288
        %v290 = vpop.f32.mrb[0].mxu0
        %291 = vmatprep.mubr.bf16.mxu0 0
        %292 = vmatmul.mubr.bf16.gmra.mrb[0].mxu0 %v239
        %v293 = vpop.f32.mrb[0].mxu0
        %v294 = vadd.f32 0.0, %v293
        %v295 = vpop.f32.mrb[0].mxu0
        %v296 = vpop.f32.mrb[0].mxu0
        %v297 = vadd.f32 0.0, %v296
        %v298 = vpop.f32.mrb[0].mxu0
        %299 = vmatprep.mubr.bf16.mxu0 0
        %300 = vmatmul.mubr.bf16.gmra.mrb[0].mxu0 %v242
        %v301 = vpop.f32.mrb[0].mxu0
        %v302 = vadd.f32 0.0, %v301
        %v303 = vpop.f32.mrb[0].mxu0
        %v304 = vpop.f32.mrb[0].mxu0
        %v305 = vadd.f32 0.0, %v304
        %v306 = vpop.f32.mrb[0].mxu0
        %307 = vmatprep.mubr.bf16.mxu0 0
        %308 = vmatmul.mubr.bf16.gmra.mrb[0].mxu0 %v245
        %v309 = vpop.f32.mrb[0].mxu0
        %v310 = vadd.f32 0.0, %v309
        %v311 = vpop.f32.mrb[0].mxu0
        %v312 = vpop.f32.mrb[0].mxu0
        %v313 = vadd.f32 0.0, %v312
        %v314 = vpop.f32.mrb[0].mxu0
        %315 = vdwg.mxu0
        %v316 = vadd.f32 %v205, %v286
        %v317 = vadd.f32 %v206, %v289
        %v318 = vadd.f32 %v207, %v294
        %v319 = vadd.f32 %v208, %v297
        %v320 = vadd.f32 %v209, %v302
        %v321 = vadd.f32 %v210, %v305
        %v322 = vadd.f32 %v211, %v310
        %v323 = vadd.f32 %v212, %v313
        %324 = vst [vmem:[#allocation2] sm:$0xff] %v316
        %325 = vst [vmem:[#allocation2 + $0x8] sm:$0xff] %v317
        %326 = vst [vmem:[#allocation2 + $0x10] sm:$0xff] %v318
        %327 = vst [vmem:[#allocation2 + $0x18] sm:$0xff] %v319
        %328 = vst [vmem:[#allocation2 + $0x20] sm:$0xff] %v320
        %329 = vst [vmem:[#allocation2 + $0x28] sm:$0xff] %v321
        %330 = vst [vmem:[#allocation2 + $0x30] sm:$0xff] %v322
        %331 = vst [vmem:[#allocation2 + $0x38] sm:$0xff] %v323
        %s332 = sadd.s32 %s194, 18
        %s333 = smul.addr %s332, 4
        %s334 = scalar_lea.vmem %s182, %s333
        %v335 = vld [vmem:[%s334] sm:$0xf]
        %v336 = vld [vmem:[%s334 + $0x8] sm:$0xf]
        %v337 = vld [vmem:[%s334 + $0x10] sm:$0xf]
        %v338 = vld [vmem:[%s334 + $0x18] sm:$0xf]
        %v339 = vld [vmem:[%s334 + $0x20] sm:$0xf]
        %v340 = vld [vmem:[%s334 + $0x28] sm:$0xf]
        %v341 = vld [vmem:[%s334 + $0x30] sm:$0xf]
        %v342 = vld [vmem:[%s334 + $0x38] sm:$0xf]
        %v343 = vld [vmem:[#allocation2] sm:$0xff]
        %v344 = vld [vmem:[#allocation2 + $0x8] sm:$0xff]
        %v345 = vld [vmem:[#allocation2 + $0x10] sm:$0xff]
        %v346 = vld [vmem:[#allocation2 + $0x18] sm:$0xff]
        %v347 = vld [vmem:[#allocation2 + $0x20] sm:$0xff]
        %v348 = vld [vmem:[#allocation2 + $0x28] sm:$0xff]
        %v349 = vld [vmem:[#allocation2 + $0x30] sm:$0xff]
        %v350 = vld [vmem:[#allocation2 + $0x38] sm:$0xff]
        %s351 = scalar_lea.vmem %s1, 2
        %v352 = vld [vmem:[%s351] sm:$0x3]
        %v361 = vunpack.c.l.b16 %v335
        %v362 = vunpack.c.l.b16 %v336
        %v363 = vunpack.c.l.b16 %v337
        %v364 = vunpack.c.l.b16 %v338
        %v365 = vunpack.c.l.b16 %v339
        %v366 = vunpack.c.l.b16 %v340
        %v367 = vunpack.c.l.b16 %v341
        %v368 = vunpack.c.l.b16 %v342
        %v369 = vpack.c.b16 %v362, %v361
        %v370 = vpack.c.b16 %v364, %v363
        %v371 = vpack.c.b16 %v366, %v365
        %v372 = vpack.c.b16 %v368, %v367
        %v374 = vsel %vm234, %v369, 0
        %v377 = vsel %vm234, %v370, 0
        %v380 = vsel %vm234, %v371, 0
        %v383 = vsel %vm234, %v372, 0
        %v386 = vsel %vm247, %v352, 0
        %388 = vmatprep.subr.bf16.mxu0 0
        %389 = vmatpush1.bf16.msra.mxu0 %v386
        %390 = vmatprep.subr.bf16.mxu0 0
        %391 = vmatpush1.bf16.msra.mxu0 0
        %392 = vmatprep.subr.bf16.mxu0 0
        %393 = vmatpush1.bf16.msra.mxu0 0
        %394 = vmatprep.subr.bf16.mxu0 0
        %395 = vmatpush1.bf16.msra.mxu0 0
        %396 = vmatprep.subr.bf16.mxu0 0
        %397 = vmatpush1.bf16.msra.mxu0 0
        %398 = vmatprep.subr.bf16.mxu0 0
        %399 = vmatpush1.bf16.msra.mxu0 0
        %400 = vmatprep.subr.bf16.mxu0 0
        %401 = vmatpush1.bf16.msra.mxu0 0
        %402 = vmatprep.subr.bf16.mxu0 0
        %403 = vmatpush1.bf16.msra.mxu0 0
        %404 = vmatprep.subr.bf16.mxu0 0
        %405 = vmatpush1.bf16.msra.mxu0 0
        %406 = vmatprep.subr.bf16.mxu0 0
        %407 = vmatpush1.bf16.msra.mxu0 0
        %408 = vmatprep.subr.bf16.mxu0 0
        %409 = vmatpush1.bf16.msra.mxu0 0
        %410 = vmatprep.subr.bf16.mxu0 0
        %411 = vmatpush1.bf16.msra.mxu0 0
        %412 = vmatprep.subr.bf16.mxu0 0
        %413 = vmatpush1.bf16.msra.mxu0 0
        %414 = vmatprep.subr.bf16.mxu0 0
        %415 = vmatpush1.bf16.msra.mxu0 0
        %416 = vmatprep.subr.bf16.mxu0 0
        %417 = vmatpush1.bf16.msra.mxu0 0
        %418 = vmatprep.subr.bf16.mxu0 0
        %419 = vmatpush1.bf16.msra.mxu0 0
        %420 = vmatprep.mubr.bf16.mxu0 0
        %421 = vmatmul.mubr.bf16.gmra.mrb[0].mxu0 %v374
        %v422 = vpop.f32.mrb[0].mxu0
        %v423 = vadd.f32 0.0, %v422
        %v424 = vpop.f32.mrb[0].mxu0
        %v425 = vpop.f32.mrb[0].mxu0
        %v426 = vadd.f32 0.0, %v425
        %v427 = vpop.f32.mrb[0].mxu0
        %428 = vmatprep.mubr.bf16.mxu0 0
        %429 = vmatmul.mubr.bf16.gmra.mrb[0].mxu0 %v377
        %v430 = vpop.f32.mrb[0].mxu0
        %v431 = vadd.f32 0.0, %v430
        %v432 = vpop.f32.mrb[0].mxu0
        %v433 = vpop.f32.mrb[0].mxu0
        %v434 = vadd.f32 0.0, %v433
        %v435 = vpop.f32.mrb[0].mxu0
        %436 = vmatprep.mubr.bf16.mxu0 0
        %437 = vmatmul.mubr.bf16.gmra.mrb[0].mxu0 %v380
        %v438 = vpop.f32.mrb[0].mxu0
        %v439 = vadd.f32 0.0, %v438
        %v440 = vpop.f32.mrb[0].mxu0
        %v441 = vpop.f32.mrb[0].mxu0
        %v442 = vadd.f32 0.0, %v441
        %v443 = vpop.f32.mrb[0].mxu0
        %444 = vmatprep.mubr.bf16.mxu0 0
        %445 = vmatmul.mubr.bf16.gmra.mrb[0].mxu0 %v383
        %v446 = vpop.f32.mrb[0].mxu0
        %v447 = vadd.f32 0.0, %v446
        %v448 = vpop.f32.mrb[0].mxu0
        %v449 = vpop.f32.mrb[0].mxu0
        %v450 = vadd.f32 0.0, %v449
        %v451 = vpop.f32.mrb[0].mxu0
        %452 = vdwg.mxu0
        %v453 = vadd.f32 %v343, %v423
        %v454 = vadd.f32 %v344, %v426
        %v455 = vadd.f32 %v345, %v431
        %v456 = vadd.f32 %v346, %v434
        %v457 = vadd.f32 %v347, %v439
        %v458 = vadd.f32 %v348, %v442
        %v459 = vadd.f32 %v349, %v447
        %v460 = vadd.f32 %v350, %v450
        %461 = vst [vmem:[#allocation2] sm:$0xff] %v453
        %462 = vst [vmem:[#allocation2 + $0x8] sm:$0xff] %v454
        %463 = vst [vmem:[#allocation2 + $0x10] sm:$0xff] %v455
        %464 = vst [vmem:[#allocation2 + $0x18] sm:$0xff] %v456
        %465 = vst [vmem:[#allocation2 + $0x20] sm:$0xff] %v457
        %466 = vst [vmem:[#allocation2 + $0x28] sm:$0xff] %v458
        %467 = vst [vmem:[#allocation2 + $0x30] sm:$0xff] %v459
        %468 = vst [vmem:[#allocation2 + $0x38] sm:$0xff] %v460
        %v469 = vld [vmem:[%s196] sm:$0xf]
        %v470 = vld [vmem:[%s196 + $0x4] sm:$0x1]
        %v471 = vld [vmem:[%s196 + $0x8] sm:$0xf]
        %v472 = vld [vmem:[%s196 + $0xc] sm:$0x1]
        %v473 = vld [vmem:[%s196 + $0x10] sm:$0xf]
        %v474 = vld [vmem:[%s196 + $0x14] sm:$0x1]
        %v475 = vld [vmem:[%s196 + $0x18] sm:$0xf]
        %v476 = vld [vmem:[%s196 + $0x1c] sm:$0x1]
        %v477 = vld [vmem:[%s196 + $0x20] sm:$0xf]
        %v478 = vld [vmem:[%s196 + $0x24] sm:$0x1]
        %v479 = vld [vmem:[%s196 + $0x28] sm:$0xf]
        %v480 = vld [vmem:[%s196 + $0x2c] sm:$0x1]
        %v481 = vld [vmem:[%s196 + $0x30] sm:$0xf]
        %v482 = vld [vmem:[%s196 + $0x34] sm:$0x1]
        %v483 = vld [vmem:[%s196 + $0x38] sm:$0xf]
        %v484 = vld [vmem:[%s196 + $0x3c] sm:$0x1]
        %vm485 = vsmask.f32 3328
        %vm486 = vsmask.f32 7440
        %vm487 = vmor %vm485, %vm486
        %v489 = vshrl.u32 %v469, 16
        %v491 = vrot.slane %v489, 4
        %v492 = vshll.u32 %v469, 16
        %v494 = vrot.slane %v492, 5
        %v495 = vor.u32 %v491, %v494
        %v496 = vrot.slane %v495, 4
        %v498 = vshll.u32 %v470, 16
        %v500 = vrot.slane %v498, 5
        %v501 = vsel %vm487, %v496, %v500
        %v503 = vshrl.u32 %v471, 16
        %v505 = vrot.slane %v503, 4
        %v506 = vshll.u32 %v471, 16
        %v508 = vrot.slane %v506, 5
        %v509 = vor.u32 %v505, %v508
        %v510 = vrot.slane %v509, 4
        %v512 = vshll.u32 %v472, 16
        %v514 = vrot.slane %v512, 5
        %v515 = vsel %vm487, %v510, %v514
        %v517 = vshrl.u32 %v473, 16
        %v519 = vrot.slane %v517, 4
        %v520 = vshll.u32 %v473, 16
        %v522 = vrot.slane %v520, 5
        %v523 = vor.u32 %v519, %v522
        %v524 = vrot.slane %v523, 4
        %v526 = vshll.u32 %v474, 16
        %v528 = vrot.slane %v526, 5
        %v529 = vsel %vm487, %v524, %v528
        %v531 = vshrl.u32 %v475, 16
        %v533 = vrot.slane %v531, 4
        %v534 = vshll.u32 %v475, 16
        %v536 = vrot.slane %v534, 5
        %v537 = vor.u32 %v533, %v536
        %v538 = vrot.slane %v537, 4
        %v540 = vshll.u32 %v476, 16
        %v542 = vrot.slane %v540, 5
        %v543 = vsel %vm487, %v538, %v542
        %v545 = vshrl.u32 %v477, 16
        %v547 = vrot.slane %v545, 4
        %v548 = vshll.u32 %v477, 16
        %v550 = vrot.slane %v548, 5
        %v551 = vor.u32 %v547, %v550
        %v552 = vrot.slane %v551, 4
        %v554 = vshll.u32 %v478, 16
        %v556 = vrot.slane %v554, 5
        %v557 = vsel %vm487, %v552, %v556
        %v559 = vshrl.u32 %v479, 16
        %v561 = vrot.slane %v559, 4
        %v562 = vshll.u32 %v479, 16
        %v564 = vrot.slane %v562, 5
        %v565 = vor.u32 %v561, %v564
        %v566 = vrot.slane %v565, 4
        %v568 = vshll.u32 %v480, 16
        %v570 = vrot.slane %v568, 5
        %v571 = vsel %vm487, %v566, %v570
        %v573 = vshrl.u32 %v481, 16
        %v575 = vrot.slane %v573, 4
        %v576 = vshll.u32 %v481, 16
        %v578 = vrot.slane %v576, 5
        %v579 = vor.u32 %v575, %v578
        %v580 = vrot.slane %v579, 4
        %v582 = vshll.u32 %v482, 16
        %v584 = vrot.slane %v582, 5
        %v585 = vsel %vm487, %v580, %v584
        %v587 = vshrl.u32 %v483, 16
        %v589 = vrot.slane %v587, 4
        %v590 = vshll.u32 %v483, 16
        %v592 = vrot.slane %v590, 5
        %v593 = vor.u32 %v589, %v592
        %v594 = vrot.slane %v593, 4
        %v596 = vshll.u32 %v484, 16
        %v598 = vrot.slane %v596, 5
        %v599 = vsel %vm487, %v594, %v598
        %v600 = vld [vmem:[#allocation2] sm:$0xff]
        %v601 = vld [vmem:[#allocation2 + $0x8] sm:$0xff]
        %v602 = vld [vmem:[#allocation2 + $0x10] sm:$0xff]
        %v603 = vld [vmem:[#allocation2 + $0x18] sm:$0xff]
        %v604 = vld [vmem:[#allocation2 + $0x20] sm:$0xff]
        %v605 = vld [vmem:[#allocation2 + $0x28] sm:$0xff]
        %v606 = vld [vmem:[#allocation2 + $0x30] sm:$0xff]
        %v607 = vld [vmem:[#allocation2 + $0x38] sm:$0xff]
        %s608 = scalar_lea.vmem %s1, 4
        %v609 = vld [vmem:[%s608] sm:$0x3]
        %v610 = vunpack.c.l.b16 %v501
        %v611 = vunpack.c.l.b16 %v515
        %v612 = vunpack.c.l.b16 %v529
        %v613 = vunpack.c.l.b16 %v543
        %v614 = vunpack.c.l.b16 %v557
        %v615 = vunpack.c.l.b16 %v571
        %v616 = vunpack.c.l.b16 %v585
        %v617 = vunpack.c.l.b16 %v599
        %v618 = vpack.c.b16 %v611, %v610
        %v619 = vpack.c.b16 %v613, %v612
        %v620 = vpack.c.b16 %v615, %v614
        %v621 = vpack.c.b16 %v617, %v616
        %v623 = vsel %vm234, %v618, 0
        %v626 = vsel %vm234, %v619, 0
        %v629 = vsel %vm234, %v620, 0
        %v632 = vsel %vm234, %v621, 0
        %v635 = vsel %vm247, %v609, 0
        %637 = vmatprep.subr.bf16.mxu0 0
        %638 = vmatpush1.bf16.msra.mxu0 %v635
        %639 = vmatprep.subr.bf16.mxu0 0
        %640 = vmatpush1.bf16.msra.mxu0 0
        %641 = vmatprep.subr.bf16.mxu0 0
        %642 = vmatpush1.bf16.msra.mxu0 0
        %643 = vmatprep.subr.bf16.mxu0 0
        %644 = vmatpush1.bf16.msra.mxu0 0
        %645 = vmatprep.subr.bf16.mxu0 0
        %646 = vmatpush1.bf16.msra.mxu0 0
        %647 = vmatprep.subr.bf16.mxu0 0
        %648 = vmatpush1.bf16.msra.mxu0 0
        %649 = vmatprep.subr.bf16.mxu0 0
        %650 = vmatpush1.bf16.msra.mxu0 0
        %651 = vmatprep.subr.bf16.mxu0 0
        %652 = vmatpush1.bf16.msra.mxu0 0
        %653 = vmatprep.subr.bf16.mxu0 0
        %654 = vmatpush1.bf16.msra.mxu0 0
        %655 = vmatprep.subr.bf16.mxu0 0
        %656 = vmatpush1.bf16.msra.mxu0 0
        %657 = vmatprep.subr.bf16.mxu0 0
        %658 = vmatpush1.bf16.msra.mxu0 0
        %659 = vmatprep.subr.bf16.mxu0 0
        %660 = vmatpush1.bf16.msra.mxu0 0
        %661 = vmatprep.subr.bf16.mxu0 0
        %662 = vmatpush1.bf16.msra.mxu0 0
        %663 = vmatprep.subr.bf16.mxu0 0
        %664 = vmatpush1.bf16.msra.mxu0 0
        %665 = vmatprep.subr.bf16.mxu0 0
        %666 = vmatpush1.bf16.msra.mxu0 0
        %667 = vmatprep.subr.bf16.mxu0 0
        %668 = vmatpush1.bf16.msra.mxu0 0
        %669 = vmatprep.mubr.bf16.mxu0 0
        %670 = vmatmul.mubr.bf16.gmra.mrb[0].mxu0 %v623
        %v671 = vpop.f32.mrb[0].mxu0
        %v672 = vadd.f32 0.0, %v671
        %v673 = vpop.f32.mrb[0].mxu0
        %v674 = vpop.f32.mrb[0].mxu0
        %v675 = vadd.f32 0.0, %v674
        %v676 = vpop.f32.mrb[0].mxu0
        %677 = vmatprep.mubr.bf16.mxu0 0
        %678 = vmatmul.mubr.bf16.gmra.mrb[0].mxu0 %v626
        %v679 = vpop.f32.mrb[0].mxu0
        %v680 = vadd.f32 0.0, %v679
        %v681 = vpop.f32.mrb[0].mxu0
        %v682 = vpop.f32.mrb[0].mxu0
        %v683 = vadd.f32 0.0, %v682
        %v684 = vpop.f32.mrb[0].mxu0
        %685 = vmatprep.mubr.bf16.mxu0 0
        %686 = vmatmul.mubr.bf16.gmra.mrb[0].mxu0 %v629
        %v687 = vpop.f32.mrb[0].mxu0
        %v688 = vadd.f32 0.0, %v687
        %v689 = vpop.f32.mrb[0].mxu0
        %v690 = vpop.f32.mrb[0].mxu0
        %v691 = vadd.f32 0.0, %v690
        %v692 = vpop.f32.mrb[0].mxu0
        %693 = vmatprep.mubr.bf16.mxu0 0
        %694 = vmatmul.mubr.bf16.gmra.mrb[0].mxu0 %v632
        %v695 = vpop.f32.mrb[0].mxu0
        %v696 = vadd.f32 0.0, %v695
        %v697 = vpop.f32.mrb[0].mxu0
        %v698 = vpop.f32.mrb[0].mxu0
        %v699 = vadd.f32 0.0, %v698
        %v700 = vpop.f32.mrb[0].mxu0
        %701 = vdwg.mxu0
        %v702 = vadd.f32 %v600, %v672
        %v703 = vadd.f32 %v601, %v675
        %v704 = vadd.f32 %v602, %v680
        %v705 = vadd.f32 %v603, %v683
        %v706 = vadd.f32 %v604, %v688
        %v707 = vadd.f32 %v605, %v691
        %v708 = vadd.f32 %v606, %v696
        %v709 = vadd.f32 %v607, %v699
        %710 = vst [vmem:[#allocation2] sm:$0xff] %v702
        %711 = vst [vmem:[#allocation2 + $0x8] sm:$0xff] %v703
        %712 = vst [vmem:[#allocation2 + $0x10] sm:$0xff] %v704
        %713 = vst [vmem:[#allocation2 + $0x18] sm:$0xff] %v705
        %714 = vst [vmem:[#allocation2 + $0x20] sm:$0xff] %v706
        %715 = vst [vmem:[#allocation2 + $0x28] sm:$0xff] %v707
        %716 = vst [vmem:[#allocation2 + $0x30] sm:$0xff] %v708
        %717 = vst [vmem:[#allocation2 + $0x38] sm:$0xff] %v709
        %s718 = sadd.s32 %s194, 36
        %s719 = smul.addr %s718, 4
        %s720 = scalar_lea.vmem %s182, %s719
        %v721 = vld [vmem:[%s720] sm:$0xf]
        %v722 = vld [vmem:[%s720 + $0x8] sm:$0xf]
        %v723 = vld [vmem:[%s720 + $0x10] sm:$0xf]
        %v724 = vld [vmem:[%s720 + $0x18] sm:$0xf]
        %v725 = vld [vmem:[%s720 + $0x20] sm:$0xf]
        %v726 = vld [vmem:[%s720 + $0x28] sm:$0xf]
        %v727 = vld [vmem:[%s720 + $0x30] sm:$0xf]
        %v728 = vld [vmem:[%s720 + $0x38] sm:$0xf]
        %v729 = vld [vmem:[#allocation2] sm:$0xff]
        %v730 = vld [vmem:[#allocation2 + $0x8] sm:$0xff]
        %v731 = vld [vmem:[#allocation2 + $0x10] sm:$0xff]
        %v732 = vld [vmem:[#allocation2 + $0x18] sm:$0xff]
        %v733 = vld [vmem:[#allocation2 + $0x20] sm:$0xff]
        %v734 = vld [vmem:[#allocation2 + $0x28] sm:$0xff]
        %v735 = vld [vmem:[#allocation2 + $0x30] sm:$0xff]
        %v736 = vld [vmem:[#allocation2 + $0x38] sm:$0xff]
        %s737 = scalar_lea.vmem %s1, 6
        %v738 = vld [vmem:[%s737] sm:$0x3]
        %v747 = vunpack.c.l.b16 %v721
        %v748 = vunpack.c.l.b16 %v722
        %v749 = vunpack.c.l.b16 %v723
        %v750 = vunpack.c.l.b16 %v724
        %v751 = vunpack.c.l.b16 %v725
        %v752 = vunpack.c.l.b16 %v726
        %v753 = vunpack.c.l.b16 %v727
        %v754 = vunpack.c.l.b16 %v728
        %v755 = vpack.c.b16 %v748, %v747
        %v756 = vpack.c.b16 %v750, %v749
        %v757 = vpack.c.b16 %v752, %v751
        %v758 = vpack.c.b16 %v754, %v753
        %v760 = vsel %vm234, %v755, 0
        %v763 = vsel %vm234, %v756, 0
        %v766 = vsel %vm234, %v757, 0
        %v769 = vsel %vm234, %v758, 0
        %v772 = vsel %vm247, %v738, 0
        %774 = vmatprep.subr.bf16.mxu0 0
        %775 = vmatpush1.bf16.msra.mxu0 %v772
        %776 = vmatprep.subr.bf16.mxu0 0
        %777 = vmatpush1.bf16.msra.mxu0 0
        %778 = vmatprep.subr.bf16.mxu0 0
        %779 = vmatpush1.bf16.msra.mxu0 0
        %780 = vmatprep.subr.bf16.mxu0 0
        %781 = vmatpush1.bf16.msra.mxu0 0
        %782 = vmatprep.subr.bf16.mxu0 0
        %783 = vmatpush1.bf16.msra.mxu0 0
        %784 = vmatprep.subr.bf16.mxu0 0
        %785 = vmatpush1.bf16.msra.mxu0 0
        %786 = vmatprep.subr.bf16.mxu0 0
        %787 = vmatpush1.bf16.msra.mxu0 0
        %788 = vmatprep.subr.bf16.mxu0 0
        %789 = vmatpush1.bf16.msra.mxu0 0
        %790 = vmatprep.subr.bf16.mxu0 0
        %791 = vmatpush1.bf16.msra.mxu0 0
        %792 = vmatprep.subr.bf16.mxu0 0
        %793 = vmatpush1.bf16.msra.mxu0 0
        %794 = vmatprep.subr.bf16.mxu0 0
        %795 = vmatpush1.bf16.msra.mxu0 0
        %796 = vmatprep.subr.bf16.mxu0 0
        %797 = vmatpush1.bf16.msra.mxu0 0
        %798 = vmatprep.subr.bf16.mxu0 0
        %799 = vmatpush1.bf16.msra.mxu0 0
        %800 = vmatprep.subr.bf16.mxu0 0
        %801 = vmatpush1.bf16.msra.mxu0 0
        %802 = vmatprep.subr.bf16.mxu0 0
        %803 = vmatpush1.bf16.msra.mxu0 0
        %804 = vmatprep.subr.bf16.mxu0 0
        %805 = vmatpush1.bf16.msra.mxu0 0
        %806 = vmatprep.mubr.bf16.mxu0 0
        %807 = vmatmul.mubr.bf16.gmra.mrb[0].mxu0 %v760
        %v808 = vpop.f32.mrb[0].mxu0
        %v809 = vadd.f32 0.0, %v808
        %v810 = vpop.f32.mrb[0].mxu0
        %v811 = vpop.f32.mrb[0].mxu0
        %v812 = vadd.f32 0.0, %v811
        %v813 = vpop.f32.mrb[0].mxu0
        %814 = vmatprep.mubr.bf16.mxu0 0
        %815 = vmatmul.mubr.bf16.gmra.mrb[0].mxu0 %v763
        %v816 = vpop.f32.mrb[0].mxu0
        %v817 = vadd.f32 0.0, %v816
        %v818 = vpop.f32.mrb[0].mxu0
        %v819 = vpop.f32.mrb[0].mxu0
        %v820 = vadd.f32 0.0, %v819
        %v821 = vpop.f32.mrb[0].mxu0
        %822 = vmatprep.mubr.bf16.mxu0 0
        %823 = vmatmul.mubr.bf16.gmra.mrb[0].mxu0 %v766
        %v824 = vpop.f32.mrb[0].mxu0
        %v825 = vadd.f32 0.0, %v824
        %v826 = vpop.f32.mrb[0].mxu0
        %v827 = vpop.f32.mrb[0].mxu0
        %v828 = vadd.f32 0.0, %v827
        %v829 = vpop.f32.mrb[0].mxu0
        %830 = vmatprep.mubr.bf16.mxu0 0
        %831 = vmatmul.mubr.bf16.gmra.mrb[0].mxu0 %v769
        %v832 = vpop.f32.mrb[0].mxu0
        %v833 = vadd.f32 0.0, %v832
        %v834 = vpop.f32.mrb[0].mxu0
        %v835 = vpop.f32.mrb[0].mxu0
        %v836 = vadd.f32 0.0, %v835
        %v837 = vpop.f32.mrb[0].mxu0
        %838 = vdwg.mxu0
        %v839 = vadd.f32 %v729, %v809
        %v840 = vadd.f32 %v730, %v812
        %v841 = vadd.f32 %v731, %v817
        %v842 = vadd.f32 %v732, %v820
        %v843 = vadd.f32 %v733, %v825
        %v844 = vadd.f32 %v734, %v828
        %v845 = vadd.f32 %v735, %v833
        %v846 = vadd.f32 %v736, %v836
        %847 = vst [vmem:[#allocation2] sm:$0xff] %v839
        %848 = vst [vmem:[#allocation2 + $0x8] sm:$0xff] %v840
        %849 = vst [vmem:[#allocation2 + $0x10] sm:$0xff] %v841
        %850 = vst [vmem:[#allocation2 + $0x18] sm:$0xff] %v842
        %851 = vst [vmem:[#allocation2 + $0x20] sm:$0xff] %v843
        %852 = vst [vmem:[#allocation2 + $0x28] sm:$0xff] %v844
        %853 = vst [vmem:[#allocation2 + $0x30] sm:$0xff] %v845
        %854 = vst [vmem:[#allocation2 + $0x38] sm:$0xff] %v846
        %s855 = sadd.s32 %s194, 54
        %s856 = smul.addr %s855, 4
        %s857 = scalar_lea.vmem %s182, %s856
        %v858 = vld [vmem:[%s857] sm:$0xf]
        %v859 = vld [vmem:[%s857 + $0x8] sm:$0xf]
        %v860 = vld [vmem:[%s857 + $0x10] sm:$0xf]
        %v861 = vld [vmem:[%s857 + $0x18] sm:$0xf]
        %v862 = vld [vmem:[%s857 + $0x20] sm:$0xf]
        %v863 = vld [vmem:[%s857 + $0x28] sm:$0xf]
        %v864 = vld [vmem:[%s857 + $0x30] sm:$0xf]
        %v865 = vld [vmem:[%s857 + $0x38] sm:$0xf]
        %v866 = vld [vmem:[#allocation2] sm:$0xff]
        %v867 = vld [vmem:[#allocation2 + $0x8] sm:$0xff]
        %v868 = vld [vmem:[#allocation2 + $0x10] sm:$0xff]
        %v869 = vld [vmem:[#allocation2 + $0x18] sm:$0xff]
        %v870 = vld [vmem:[#allocation2 + $0x20] sm:$0xff]
        %v871 = vld [vmem:[#allocation2 + $0x28] sm:$0xff]
        %v872 = vld [vmem:[#allocation2 + $0x30] sm:$0xff]
        %v873 = vld [vmem:[#allocation2 + $0x38] sm:$0xff]
        %s874 = scalar_lea.vmem %s1, 8
        %v875 = vld [vmem:[%s874] sm:$0x3]
        %v884 = vunpack.c.l.b16 %v858
        %v885 = vunpack.c.l.b16 %v859
        %v886 = vunpack.c.l.b16 %v860
        %v887 = vunpack.c.l.b16 %v861
        %v888 = vunpack.c.l.b16 %v862
        %v889 = vunpack.c.l.b16 %v863
        %v890 = vunpack.c.l.b16 %v864
        %v891 = vunpack.c.l.b16 %v865
        %v892 = vpack.c.b16 %v885, %v884
        %v893 = vpack.c.b16 %v887, %v886
        %v894 = vpack.c.b16 %v889, %v888
        %v895 = vpack.c.b16 %v891, %v890
        %v897 = vsel %vm234, %v892, 0
        %v900 = vsel %vm234, %v893, 0
        %v903 = vsel %vm234, %v894, 0
        %v906 = vsel %vm234, %v895, 0
        %v909 = vsel %vm247, %v875, 0
        %911 = vmatprep.subr.bf16.mxu0 0
        %912 = vmatpush1.bf16.msra.mxu0 %v909
        %913 = vmatprep.subr.bf16.mxu0 0
        %914 = vmatpush1.bf16.msra.mxu0 0
        %915 = vmatprep.subr.bf16.mxu0 0
        %916 = vmatpush1.bf16.msra.mxu0 0
        %917 = vmatprep.subr.bf16.mxu0 0
        %918 = vmatpush1.bf16.msra.mxu0 0
        %919 = vmatprep.subr.bf16.mxu0 0
        %920 = vmatpush1.bf16.msra.mxu0 0
        %921 = vmatprep.subr.bf16.mxu0 0
        %922 = vmatpush1.bf16.msra.mxu0 0
        %923 = vmatprep.subr.bf16.mxu0 0
        %924 = vmatpush1.bf16.msra.mxu0 0
        %925 = vmatprep.subr.bf16.mxu0 0
        %926 = vmatpush1.bf16.msra.mxu0 0
        %927 = vmatprep.subr.bf16.mxu0 0
        %928 = vmatpush1.bf16.msra.mxu0 0
        %929 = vmatprep.subr.bf16.mxu0 0
        %930 = vmatpush1.bf16.msra.mxu0 0
        %931 = vmatprep.subr.bf16.mxu0 0
        %932 = vmatpush1.bf16.msra.mxu0 0
        %933 = vmatprep.subr.bf16.mxu0 0
        %934 = vmatpush1.bf16.msra.mxu0 0
        %935 = vmatprep.subr.bf16.mxu0 0
        %936 = vmatpush1.bf16.msra.mxu0 0
        %937 = vmatprep.subr.bf16.mxu0 0
        %938 = vmatpush1.bf16.msra.mxu0 0
        %939 = vmatprep.subr.bf16.mxu0 0
        %940 = vmatpush1.bf16.msra.mxu0 0
        %941 = vmatprep.subr.bf16.mxu0 0
        %942 = vmatpush1.bf16.msra.mxu0 0
        %943 = vmatprep.mubr.bf16.mxu0 0
        %944 = vmatmul.mubr.bf16.gmra.mrb[0].mxu0 %v897
        %v945 = vpop.f32.mrb[0].mxu0
        %v946 = vadd.f32 0.0, %v945
        %v947 = vpop.f32.mrb[0].mxu0
        %v948 = vpop.f32.mrb[0].mxu0
        %v949 = vadd.f32 0.0, %v948
        %v950 = vpop.f32.mrb[0].mxu0
        %951 = vmatprep.mubr.bf16.mxu0 0
        %952 = vmatmul.mubr.bf16.gmra.mrb[0].mxu0 %v900
        %v953 = vpop.f32.mrb[0].mxu0
        %v954 = vadd.f32 0.0, %v953
        %v955 = vpop.f32.mrb[0].mxu0
        %v956 = vpop.f32.mrb[0].mxu0
        %v957 = vadd.f32 0.0, %v956
        %v958 = vpop.f32.mrb[0].mxu0
        %959 = vmatprep.mubr.bf16.mxu0 0
        %960 = vmatmul.mubr.bf16.gmra.mrb[0].mxu0 %v903
        %v961 = vpop.f32.mrb[0].mxu0
        %v962 = vadd.f32 0.0, %v961
        %v963 = vpop.f32.mrb[0].mxu0
        %v964 = vpop.f32.mrb[0].mxu0
        %v965 = vadd.f32 0.0, %v964
        %v966 = vpop.f32.mrb[0].mxu0
        %967 = vmatprep.mubr.bf16.mxu0 0
        %968 = vmatmul.mubr.bf16.gmra.mrb[0].mxu0 %v906
        %v969 = vpop.f32.mrb[0].mxu0
        %v970 = vadd.f32 0.0, %v969
        %v971 = vpop.f32.mrb[0].mxu0
        %v972 = vpop.f32.mrb[0].mxu0
        %v973 = vadd.f32 0.0, %v972
        %v974 = vpop.f32.mrb[0].mxu0
        %975 = vdwg.mxu0
        %v976 = vadd.f32 %v866, %v946
        %v977 = vadd.f32 %v867, %v949
        %v978 = vadd.f32 %v868, %v954
        %v979 = vadd.f32 %v869, %v957
        %v980 = vadd.f32 %v870, %v962
        %v981 = vadd.f32 %v871, %v965
        %v982 = vadd.f32 %v872, %v970
        %v983 = vadd.f32 %v873, %v973
        %984 = vst [vmem:[#allocation2] sm:$0xff] %v976
        %985 = vst [vmem:[#allocation2 + $0x8] sm:$0xff] %v977
        %986 = vst [vmem:[#allocation2 + $0x10] sm:$0xff] %v978
        %987 = vst [vmem:[#allocation2 + $0x18] sm:$0xff] %v979
        %988 = vst [vmem:[#allocation2 + $0x20] sm:$0xff] %v980
        %989 = vst [vmem:[#allocation2 + $0x28] sm:$0xff] %v981
        %990 = vst [vmem:[#allocation2 + $0x30] sm:$0xff] %v982
        %991 = vst [vmem:[#allocation2 + $0x38] sm:$0xff] %v983
        %v992 = vld [vmem:[%s720] sm:$0xf]
        %v993 = vld [vmem:[%s720 + $0x4] sm:$0x1]
        %v994 = vld [vmem:[%s720 + $0x8] sm:$0xf]
        %v995 = vld [vmem:[%s720 + $0xc] sm:$0x1]
        %v996 = vld [vmem:[%s720 + $0x10] sm:$0xf]
        %v997 = vld [vmem:[%s720 + $0x14] sm:$0x1]
        %v998 = vld [vmem:[%s720 + $0x18] sm:$0xf]
        %v999 = vld [vmem:[%s720 + $0x1c] sm:$0x1]
        %v1000 = vld [vmem:[%s720 + $0x20] sm:$0xf]
        %v1001 = vld [vmem:[%s720 + $0x24] sm:$0x1]
        %v1002 = vld [vmem:[%s720 + $0x28] sm:$0xf]
        %v1003 = vld [vmem:[%s720 + $0x2c] sm:$0x1]
        %v1004 = vld [vmem:[%s720 + $0x30] sm:$0xf]
        %v1005 = vld [vmem:[%s720 + $0x34] sm:$0x1]
        %v1006 = vld [vmem:[%s720 + $0x38] sm:$0xf]
        %v1007 = vld [vmem:[%s720 + $0x3c] sm:$0x1]
        %v1009 = vshrl.u32 %v992, 16
        %v1011 = vrot.slane %v1009, 4
        %v1012 = vshll.u32 %v992, 16
        %v1014 = vrot.slane %v1012, 5
        %v1015 = vor.u32 %v1011, %v1014
        %v1016 = vrot.slane %v1015, 4
        %v1018 = vshll.u32 %v993, 16
        %v1020 = vrot.slane %v1018, 5
        %v1021 = vsel %vm487, %v1016, %v1020
        %v1023 = vshrl.u32 %v994, 16
        %v1025 = vrot.slane %v1023, 4
        %v1026 = vshll.u32 %v994, 16
        %v1028 = vrot.slane %v1026, 5
        %v1029 = vor.u32 %v1025, %v1028
        %v1030 = vrot.slane %v1029, 4
        %v1032 = vshll.u32 %v995, 16
        %v1034 = vrot.slane %v1032, 5
        %v1035 = vsel %vm487, %v1030, %v1034
        %v1037 = vshrl.u32 %v996, 16
        %v1039 = vrot.slane %v1037, 4
        %v1040 = vshll.u32 %v996, 16
        %v1042 = vrot.slane %v1040, 5
        %v1043 = vor.u32 %v1039, %v1042
        %v1044 = vrot.slane %v1043, 4
        %v1046 = vshll.u32 %v997, 16
        %v1048 = vrot.slane %v1046, 5
        %v1049 = vsel %vm487, %v1044, %v1048
        %v1051 = vshrl.u32 %v998, 16
        %v1053 = vrot.slane %v1051, 4
        %v1054 = vshll.u32 %v998, 16
        %v1056 = vrot.slane %v1054, 5
        %v1057 = vor.u32 %v1053, %v1056
        %v1058 = vrot.slane %v1057, 4
        %v1060 = vshll.u32 %v999, 16
        %v1062 = vrot.slane %v1060, 5
        %v1063 = vsel %vm487, %v1058, %v1062
        %v1065 = vshrl.u32 %v1000, 16
        %v1067 = vrot.slane %v1065, 4
        %v1068 = vshll.u32 %v1000, 16
        %v1070 = vrot.slane %v1068, 5
        %v1071 = vor.u32 %v1067, %v1070
        %v1072 = vrot.slane %v1071, 4
        %v1074 = vshll.u32 %v1001, 16
        %v1076 = vrot.slane %v1074, 5
        %v1077 = vsel %vm487, %v1072, %v1076
        %v1079 = vshrl.u32 %v1002, 16
        %v1081 = vrot.slane %v1079, 4
        %v1082 = vshll.u32 %v1002, 16
        %v1084 = vrot.slane %v1082, 5
        %v1085 = vor.u32 %v1081, %v1084
        %v1086 = vrot.slane %v1085, 4
        %v1088 = vshll.u32 %v1003, 16
        %v1090 = vrot.slane %v1088, 5
        %v1091 = vsel %vm487, %v1086, %v1090
        %v1093 = vshrl.u32 %v1004, 16
        %v1095 = vrot.slane %v1093, 4
        %v1096 = vshll.u32 %v1004, 16
        %v1098 = vrot.slane %v1096, 5
        %v1099 = vor.u32 %v1095, %v1098
        %v1100 = vrot.slane %v1099, 4
        %v1102 = vshll.u32 %v1005, 16
        %v1104 = vrot.slane %v1102, 5
        %v1105 = vsel %vm487, %v1100, %v1104
        %v1107 = vshrl.u32 %v1006, 16
        %v1109 = vrot.slane %v1107, 4
        %v1110 = vshll.u32 %v1006, 16
        %v1112 = vrot.slane %v1110, 5
        %v1113 = vor.u32 %v1109, %v1112
        %v1114 = vrot.slane %v1113, 4
        %v1116 = vshll.u32 %v1007, 16
        %v1118 = vrot.slane %v1116, 5
        %v1119 = vsel %vm487, %v1114, %v1118
        %v1120 = vld [vmem:[#allocation2] sm:$0xff]
        %v1121 = vld [vmem:[#allocation2 + $0x8] sm:$0xff]
        %v1122 = vld [vmem:[#allocation2 + $0x10] sm:$0xff]
        %v1123 = vld [vmem:[#allocation2 + $0x18] sm:$0xff]
        %v1124 = vld [vmem:[#allocation2 + $0x20] sm:$0xff]
        %v1125 = vld [vmem:[#allocation2 + $0x28] sm:$0xff]
        %v1126 = vld [vmem:[#allocation2 + $0x30] sm:$0xff]
        %v1127 = vld [vmem:[#allocation2 + $0x38] sm:$0xff]
        %s1128 = scalar_lea.vmem %s1, 10
        %v1129 = vld [vmem:[%s1128] sm:$0x3]
        %v1130 = vunpack.c.l.b16 %v1021
        %v1131 = vunpack.c.l.b16 %v1035
        %v1132 = vunpack.c.l.b16 %v1049
        %v1133 = vunpack.c.l.b16 %v1063
        %v1134 = vunpack.c.l.b16 %v1077
        %v1135 = vunpack.c.l.b16 %v1091
        %v1136 = vunpack.c.l.b16 %v1105
        %v1137 = vunpack.c.l.b16 %v1119
        %v1138 = vpack.c.b16 %v1131, %v1130
        %v1139 = vpack.c.b16 %v1133, %v1132
        %v1140 = vpack.c.b16 %v1135, %v1134
        %v1141 = vpack.c.b16 %v1137, %v1136
        %v1143 = vsel %vm234, %v1138, 0
        %v1146 = vsel %vm234, %v1139, 0
        %v1149 = vsel %vm234, %v1140, 0
        %v1152 = vsel %vm234, %v1141, 0
        %v1155 = vsel %vm247, %v1129, 0
        %1157 = vmatprep.subr.bf16.mxu0 0
        %1158 = vmatpush1.bf16.msra.mxu0 %v1155
        %1159 = vmatprep.subr.bf16.mxu0 0
        %1160 = vmatpush1.bf16.msra.mxu0 0
        %1161 = vmatprep.subr.bf16.mxu0 0
        %1162 = vmatpush1.bf16.msra.mxu0 0
        %1163 = vmatprep.subr.bf16.mxu0 0
        %1164 = vmatpush1.bf16.msra.mxu0 0
        %1165 = vmatprep.subr.bf16.mxu0 0
        %1166 = vmatpush1.bf16.msra.mxu0 0
        %1167 = vmatprep.subr.bf16.mxu0 0
        %1168 = vmatpush1.bf16.msra.mxu0 0
        %1169 = vmatprep.subr.bf16.mxu0 0
        %1170 = vmatpush1.bf16.msra.mxu0 0
        %1171 = vmatprep.subr.bf16.mxu0 0
        %1172 = vmatpush1.bf16.msra.mxu0 0
        %1173 = vmatprep.subr.bf16.mxu0 0
        %1174 = vmatpush1.bf16.msra.mxu0 0
        %1175 = vmatprep.subr.bf16.mxu0 0
        %1176 = vmatpush1.bf16.msra.mxu0 0
        %1177 = vmatprep.subr.bf16.mxu0 0
        %1178 = vmatpush1.bf16.msra.mxu0 0
        %1179 = vmatprep.subr.bf16.mxu0 0
        %1180 = vmatpush1.bf16.msra.mxu0 0
        %1181 = vmatprep.subr.bf16.mxu0 0
        %1182 = vmatpush1.bf16.msra.mxu0 0
        %1183 = vmatprep.subr.bf16.mxu0 0
        %1184 = vmatpush1.bf16.msra.mxu0 0
        %1185 = vmatprep.subr.bf16.mxu0 0
        %1186 = vmatpush1.bf16.msra.mxu0 0
        %1187 = vmatprep.subr.bf16.mxu0 0
        %1188 = vmatpush1.bf16.msra.mxu0 0
        %1189 = vmatprep.mubr.bf16.mxu0 0
        %1190 = vmatmul.mubr.bf16.gmra.mrb[0].mxu0 %v1143
        %v1191 = vpop.f32.mrb[0].mxu0
        %v1192 = vadd.f32 0.0, %v1191
        %v1193 = vpop.f32.mrb[0].mxu0
        %v1194 = vpop.f32.mrb[0].mxu0
        %v1195 = vadd.f32 0.0, %v1194
        %v1196 = vpop.f32.mrb[0].mxu0
        %1197 = vmatprep.mubr.bf16.mxu0 0
        %1198 = vmatmul.mubr.bf16.gmra.mrb[0].mxu0 %v1146
        %v1199 = vpop.f32.mrb[0].mxu0
        %v1200 = vadd.f32 0.0, %v1199
        %v1201 = vpop.f32.mrb[0].mxu0
        %v1202 = vpop.f32.mrb[0].mxu0
        %v1203 = vadd.f32 0.0, %v1202
        %v1204 = vpop.f32.mrb[0].mxu0
        %1205 = vmatprep.mubr.bf16.mxu0 0
        %1206 = vmatmul.mubr.bf16.gmra.mrb[0].mxu0 %v1149
        %v1207 = vpop.f32.mrb[0].mxu0
        %v1208 = vadd.f32 0.0, %v1207
        %v1209 = vpop.f32.mrb[0].mxu0
        %v1210 = vpop.f32.mrb[0].mxu0
        %v1211 = vadd.f32 0.0, %v1210
        %v1212 = vpop.f32.mrb[0].mxu0
        %1213 = vmatprep.mubr.bf16.mxu0 0
        %1214 = vmatmul.mubr.bf16.gmra.mrb[0].mxu0 %v1152
        %v1215 = vpop.f32.mrb[0].mxu0
        %v1216 = vadd.f32 0.0, %v1215
        %v1217 = vpop.f32.mrb[0].mxu0
        %v1218 = vpop.f32.mrb[0].mxu0
        %v1219 = vadd.f32 0.0, %v1218
        %v1220 = vpop.f32.mrb[0].mxu0
        %1221 = vdwg.mxu0
        %v1222 = vadd.f32 %v1120, %v1192
        %v1223 = vadd.f32 %v1121, %v1195
        %v1224 = vadd.f32 %v1122, %v1200
        %v1225 = vadd.f32 %v1123, %v1203
        %v1226 = vadd.f32 %v1124, %v1208
        %v1227 = vadd.f32 %v1125, %v1211
        %v1228 = vadd.f32 %v1126, %v1216
        %v1229 = vadd.f32 %v1127, %v1219
        %1230 = vst [vmem:[#allocation2] sm:$0xff] %v1222
        %1231 = vst [vmem:[#allocation2 + $0x8] sm:$0xff] %v1223
        %1232 = vst [vmem:[#allocation2 + $0x10] sm:$0xff] %v1224
        %1233 = vst [vmem:[#allocation2 + $0x18] sm:$0xff] %v1225
        %1234 = vst [vmem:[#allocation2 + $0x20] sm:$0xff] %v1226
        %1235 = vst [vmem:[#allocation2 + $0x28] sm:$0xff] %v1227
        %1236 = vst [vmem:[#allocation2 + $0x30] sm:$0xff] %v1228
        %1237 = vst [vmem:[#allocation2 + $0x38] sm:$0xff] %v1229
        %s1238 = sadd.s32 %s185, 1
        %s1239 = smul.u32 %s1238, 2
        %s1240 = smul.addr %s1239, 4
        %s1241 = scalar_lea.vmem %s182, %s1240
        %v1242 = vld [vmem:[%s1241] sm:$0xf]
        %v1243 = vld [vmem:[%s1241 + $0x8] sm:$0xf]
        %v1244 = vld [vmem:[%s1241 + $0x10] sm:$0xf]
        %v1245 = vld [vmem:[%s1241 + $0x18] sm:$0xf]
        %v1246 = vld [vmem:[%s1241 + $0x20] sm:$0xf]
        %v1247 = vld [vmem:[%s1241 + $0x28] sm:$0xf]
        %v1248 = vld [vmem:[%s1241 + $0x30] sm:$0xf]
        %v1249 = vld [vmem:[%s1241 + $0x38] sm:$0xf]
        %v1250 = vld [vmem:[#allocation2] sm:$0xff]
        %v1251 = vld [vmem:[#allocation2 + $0x8] sm:$0xff]
        %v1252 = vld [vmem:[#allocation2 + $0x10] sm:$0xff]
        %v1253 = vld [vmem:[#allocation2 + $0x18] sm:$0xff]
        %v1254 = vld [vmem:[#allocation2 + $0x20] sm:$0xff]
        %v1255 = vld [vmem:[#allocation2 + $0x28] sm:$0xff]
        %v1256 = vld [vmem:[#allocation2 + $0x30] sm:$0xff]
        %v1257 = vld [vmem:[#allocation2 + $0x38] sm:$0xff]
        %s1258 = scalar_lea.vmem %s1, 12
        %v1259 = vld [vmem:[%s1258] sm:$0x3]
        %v1268 = vunpack.c.l.b16 %v1242
        %v1269 = vunpack.c.l.b16 %v1243
        %v1270 = vunpack.c.l.b16 %v1244
        %v1271 = vunpack.c.l.b16 %v1245
        %v1272 = vunpack.c.l.b16 %v1246
        %v1273 = vunpack.c.l.b16 %v1247
        %v1274 = vunpack.c.l.b16 %v1248
        %v1275 = vunpack.c.l.b16 %v1249
        %v1276 = vpack.c.b16 %v1269, %v1268
        %v1277 = vpack.c.b16 %v1271, %v1270
        %v1278 = vpack.c.b16 %v1273, %v1272
        %v1279 = vpack.c.b16 %v1275, %v1274
        %v1281 = vsel %vm234, %v1276, 0
        %v1284 = vsel %vm234, %v1277, 0
        %v1287 = vsel %vm234, %v1278, 0
        %v1290 = vsel %vm234, %v1279, 0
        %v1293 = vsel %vm247, %v1259, 0
        %1295 = vmatprep.subr.bf16.mxu0 0
        %1296 = vmatpush1.bf16.msra.mxu0 %v1293
        %1297 = vmatprep.subr.bf16.mxu0 0
        %1298 = vmatpush1.bf16.msra.mxu0 0
        %1299 = vmatprep.subr.bf16.mxu0 0
        %1300 = vmatpush1.bf16.msra.mxu0 0
        %1301 = vmatprep.subr.bf16.mxu0 0
        %1302 = vmatpush1.bf16.msra.mxu0 0
        %1303 = vmatprep.subr.bf16.mxu0 0
        %1304 = vmatpush1.bf16.msra.mxu0 0
        %1305 = vmatprep.subr.bf16.mxu0 0
        %1306 = vmatpush1.bf16.msra.mxu0 0
        %1307 = vmatprep.subr.bf16.mxu0 0
        %1308 = vmatpush1.bf16.msra.mxu0 0
        %1309 = vmatprep.subr.bf16.mxu0 0
        %1310 = vmatpush1.bf16.msra.mxu0 0
        %1311 = vmatprep.subr.bf16.mxu0 0
        %1312 = vmatpush1.bf16.msra.mxu0 0
        %1313 = vmatprep.subr.bf16.mxu0 0
        %1314 = vmatpush1.bf16.msra.mxu0 0
        %1315 = vmatprep.subr.bf16.mxu0 0
        %1316 = vmatpush1.bf16.msra.mxu0 0
        %1317 = vmatprep.subr.bf16.mxu0 0
        %1318 = vmatpush1.bf16.msra.mxu0 0
        %1319 = vmatprep.subr.bf16.mxu0 0
        %1320 = vmatpush1.bf16.msra.mxu0 0
        %1321 = vmatprep.subr.bf16.mxu0 0
        %1322 = vmatpush1.bf16.msra.mxu0 0
        %1323 = vmatprep.subr.bf16.mxu0 0
        %1324 = vmatpush1.bf16.msra.mxu0 0
        %1325 = vmatprep.subr.bf16.mxu0 0
        %1326 = vmatpush1.bf16.msra.mxu0 0
        %1327 = vmatprep.mubr.bf16.mxu0 0
        %1328 = vmatmul.mubr.bf16.gmra.mrb[0].mxu0 %v1281
        %v1329 = vpop.f32.mrb[0].mxu0
        %v1330 = vadd.f32 0.0, %v1329
        %v1331 = vpop.f32.mrb[0].mxu0
        %v1332 = vpop.f32.mrb[0].mxu0
        %v1333 = vadd.f32 0.0, %v1332
        %v1334 = vpop.f32.mrb[0].mxu0
        %1335 = vmatprep.mubr.bf16.mxu0 0
        %1336 = vmatmul.mubr.bf16.gmra.mrb[0].mxu0 %v1284
        %v1337 = vpop.f32.mrb[0].mxu0
        %v1338 = vadd.f32 0.0, %v1337
        %v1339 = vpop.f32.mrb[0].mxu0
        %v1340 = vpop.f32.mrb[0].mxu0
        %v1341 = vadd.f32 0.0, %v1340
        %v1342 = vpop.f32.mrb[0].mxu0
        %1343 = vmatprep.mubr.bf16.mxu0 0
        %1344 = vmatmul.mubr.bf16.gmra.mrb[0].mxu0 %v1287
        %v1345 = vpop.f32.mrb[0].mxu0
        %v1346 = vadd.f32 0.0, %v1345
        %v1347 = vpop.f32.mrb[0].mxu0
        %v1348 = vpop.f32.mrb[0].mxu0
        %v1349 = vadd.f32 0.0, %v1348
        %v1350 = vpop.f32.mrb[0].mxu0
        %1351 = vmatprep.mubr.bf16.mxu0 0
        %1352 = vmatmul.mubr.bf16.gmra.mrb[0].mxu0 %v1290
        %v1353 = vpop.f32.mrb[0].mxu0
        %v1354 = vadd.f32 0.0, %v1353
        %v1355 = vpop.f32.mrb[0].mxu0
        %v1356 = vpop.f32.mrb[0].mxu0
        %v1357 = vadd.f32 0.0, %v1356
        %v1358 = vpop.f32.mrb[0].mxu0
        %1359 = vdwg.mxu0
        %v1360 = vadd.f32 %v1250, %v1330
        %v1361 = vadd.f32 %v1251, %v1333
        %v1362 = vadd.f32 %v1252, %v1338
        %v1363 = vadd.f32 %v1253, %v1341
        %v1364 = vadd.f32 %v1254, %v1346
        %v1365 = vadd.f32 %v1255, %v1349
        %v1366 = vadd.f32 %v1256, %v1354
        %v1367 = vadd.f32 %v1257, %v1357
        %1368 = vst [vmem:[#allocation2] sm:$0xff] %v1360
        %1369 = vst [vmem:[#allocation2 + $0x8] sm:$0xff] %v1361
        %1370 = vst [vmem:[#allocation2 + $0x10] sm:$0xff] %v1362
        %1371 = vst [vmem:[#allocation2 + $0x18] sm:$0xff] %v1363
        %1372 = vst [vmem:[#allocation2 + $0x20] sm:$0xff] %v1364
        %1373 = vst [vmem:[#allocation2 + $0x28] sm:$0xff] %v1365
        %1374 = vst [vmem:[#allocation2 + $0x30] sm:$0xff] %v1366
        %1375 = vst [vmem:[#allocation2 + $0x38] sm:$0xff] %v1367
        %s1376 = sadd.s32 %s1239, 18
        %s1377 = smul.addr %s1376, 4
        %s1378 = scalar_lea.vmem %s182, %s1377
        %v1379 = vld [vmem:[%s1378] sm:$0xf]
        %v1380 = vld [vmem:[%s1378 + $0x8] sm:$0xf]
        %v1381 = vld [vmem:[%s1378 + $0x10] sm:$0xf]
        %v1382 = vld [vmem:[%s1378 + $0x18] sm:$0xf]
        %v1383 = vld [vmem:[%s1378 + $0x20] sm:$0xf]
        %v1384 = vld [vmem:[%s1378 + $0x28] sm:$0xf]
        %v1385 = vld [vmem:[%s1378 + $0x30] sm:$0xf]
        %v1386 = vld [vmem:[%s1378 + $0x38] sm:$0xf]
        %v1387 = vld [vmem:[#allocation2] sm:$0xff]
        %v1388 = vld [vmem:[#allocation2 + $0x8] sm:$0xff]
        %v1389 = vld [vmem:[#allocation2 + $0x10] sm:$0xff]
        %v1390 = vld [vmem:[#allocation2 + $0x18] sm:$0xff]
        %v1391 = vld [vmem:[#allocation2 + $0x20] sm:$0xff]
        %v1392 = vld [vmem:[#allocation2 + $0x28] sm:$0xff]
        %v1393 = vld [vmem:[#allocation2 + $0x30] sm:$0xff]
        %v1394 = vld [vmem:[#allocation2 + $0x38] sm:$0xff]
        %s1395 = scalar_lea.vmem %s1, 14
        %v1396 = vld [vmem:[%s1395] sm:$0x3]
        %v1405 = vunpack.c.l.b16 %v1379
        %v1406 = vunpack.c.l.b16 %v1380
        %v1407 = vunpack.c.l.b16 %v1381
        %v1408 = vunpack.c.l.b16 %v1382
        %v1409 = vunpack.c.l.b16 %v1383
        %v1410 = vunpack.c.l.b16 %v1384
        %v1411 = vunpack.c.l.b16 %v1385
        %v1412 = vunpack.c.l.b16 %v1386
        %v1413 = vpack.c.b16 %v1406, %v1405
        %v1414 = vpack.c.b16 %v1408, %v1407
        %v1415 = vpack.c.b16 %v1410, %v1409
        %v1416 = vpack.c.b16 %v1412, %v1411
        %v1418 = vsel %vm234, %v1413, 0
        %v1421 = vsel %vm234, %v1414, 0
        %v1424 = vsel %vm234, %v1415, 0
        %v1427 = vsel %vm234, %v1416, 0
        %v1430 = vsel %vm247, %v1396, 0
        %1432 = vmatprep.subr.bf16.mxu0 0
        %1433 = vmatpush1.bf16.msra.mxu0 %v1430
        %1434 = vmatprep.subr.bf16.mxu0 0
        %1435 = vmatpush1.bf16.msra.mxu0 0
        %1436 = vmatprep.subr.bf16.mxu0 0
        %1437 = vmatpush1.bf16.msra.mxu0 0
        %1438 = vmatprep.subr.bf16.mxu0 0
        %1439 = vmatpush1.bf16.msra.mxu0 0
        %1440 = vmatprep.subr.bf16.mxu0 0
        %1441 = vmatpush1.bf16.msra.mxu0 0
        %1442 = vmatprep.subr.bf16.mxu0 0
        %1443 = vmatpush1.bf16.msra.mxu0 0
        %1444 = vmatprep.subr.bf16.mxu0 0
        %1445 = vmatpush1.bf16.msra.mxu0 0
        %1446 = vmatprep.subr.bf16.mxu0 0
        %1447 = vmatpush1.bf16.msra.mxu0 0
        %1448 = vmatprep.subr.bf16.mxu0 0
        %1449 = vmatpush1.bf16.msra.mxu0 0
        %1450 = vmatprep.subr.bf16.mxu0 0
        %1451 = vmatpush1.bf16.msra.mxu0 0
        %1452 = vmatprep.subr.bf16.mxu0 0
        %1453 = vmatpush1.bf16.msra.mxu0 0
        %1454 = vmatprep.subr.bf16.mxu0 0
        %1455 = vmatpush1.bf16.msra.mxu0 0
        %1456 = vmatprep.subr.bf16.mxu0 0
        %1457 = vmatpush1.bf16.msra.mxu0 0
        %1458 = vmatprep.subr.bf16.mxu0 0
        %1459 = vmatpush1.bf16.msra.mxu0 0
        %1460 = vmatprep.subr.bf16.mxu0 0
        %1461 = vmatpush1.bf16.msra.mxu0 0
        %1462 = vmatprep.subr.bf16.mxu0 0
        %1463 = vmatpush1.bf16.msra.mxu0 0
        %1464 = vmatprep.mubr.bf16.mxu0 0
        %1465 = vmatmul.mubr.bf16.gmra.mrb[0].mxu0 %v1418
        %v1466 = vpop.f32.mrb[0].mxu0
        %v1467 = vadd.f32 0.0, %v1466
        %v1468 = vpop.f32.mrb[0].mxu0
        %v1469 = vpop.f32.mrb[0].mxu0
        %v1470 = vadd.f32 0.0, %v1469
        %v1471 = vpop.f32.mrb[0].mxu0
        %1472 = vmatprep.mubr.bf16.mxu0 0
        %1473 = vmatmul.mubr.bf16.gmra.mrb[0].mxu0 %v1421
        %v1474 = vpop.f32.mrb[0].mxu0
        %v1475 = vadd.f32 0.0, %v1474
        %v1476 = vpop.f32.mrb[0].mxu0
        %v1477 = vpop.f32.mrb[0].mxu0
        %v1478 = vadd.f32 0.0, %v1477
        %v1479 = vpop.f32.mrb[0].mxu0
        %1480 = vmatprep.mubr.bf16.mxu0 0
        %1481 = vmatmul.mubr.bf16.gmra.mrb[0].mxu0 %v1424
        %v1482 = vpop.f32.mrb[0].mxu0
        %v1483 = vadd.f32 0.0, %v1482
        %v1484 = vpop.f32.mrb[0].mxu0
        %v1485 = vpop.f32.mrb[0].mxu0
        %v1486 = vadd.f32 0.0, %v1485
        %v1487 = vpop.f32.mrb[0].mxu0
        %1488 = vmatprep.mubr.bf16.mxu0 0
        %1489 = vmatmul.mubr.bf16.gmra.mrb[0].mxu0 %v1427
        %v1490 = vpop.f32.mrb[0].mxu0
        %v1491 = vadd.f32 0.0, %v1490
        %v1492 = vpop.f32.mrb[0].mxu0
        %v1493 = vpop.f32.mrb[0].mxu0
        %v1494 = vadd.f32 0.0, %v1493
        %v1495 = vpop.f32.mrb[0].mxu0
        %1496 = vdwg.mxu0
        %v1497 = vadd.f32 %v1387, %v1467
        %v1498 = vadd.f32 %v1388, %v1470
        %v1499 = vadd.f32 %v1389, %v1475
        %v1500 = vadd.f32 %v1390, %v1478
        %v1501 = vadd.f32 %v1391, %v1483
        %v1502 = vadd.f32 %v1392, %v1486
        %v1503 = vadd.f32 %v1393, %v1491
        %v1504 = vadd.f32 %v1394, %v1494
        %1505 = vst [vmem:[#allocation2] sm:$0xff] %v1497
        %1506 = vst [vmem:[#allocation2 + $0x8] sm:$0xff] %v1498
        %1507 = vst [vmem:[#allocation2 + $0x10] sm:$0xff] %v1499
        %1508 = vst [vmem:[#allocation2 + $0x18] sm:$0xff] %v1500
        %1509 = vst [vmem:[#allocation2 + $0x20] sm:$0xff] %v1501
        %1510 = vst [vmem:[#allocation2 + $0x28] sm:$0xff] %v1502
        %1511 = vst [vmem:[#allocation2 + $0x30] sm:$0xff] %v1503
        %1512 = vst [vmem:[#allocation2 + $0x38] sm:$0xff] %v1504
        %v1513 = vld [vmem:[%s1241] sm:$0xf]
        %v1514 = vld [vmem:[%s1241 + $0x4] sm:$0x1]
        %v1515 = vld [vmem:[%s1241 + $0x8] sm:$0xf]
        %v1516 = vld [vmem:[%s1241 + $0xc] sm:$0x1]
        %v1517 = vld [vmem:[%s1241 + $0x10] sm:$0xf]
        %v1518 = vld [vmem:[%s1241 + $0x14] sm:$0x1]
        %v1519 = vld [vmem:[%s1241 + $0x18] sm:$0xf]
        %v1520 = vld [vmem:[%s1241 + $0x1c] sm:$0x1]
        %v1521 = vld [vmem:[%s1241 + $0x20] sm:$0xf]
        %v1522 = vld [vmem:[%s1241 + $0x24] sm:$0x1]
        %v1523 = vld [vmem:[%s1241 + $0x28] sm:$0xf]
        %v1524 = vld [vmem:[%s1241 + $0x2c] sm:$0x1]
        %v1525 = vld [vmem:[%s1241 + $0x30] sm:$0xf]
        %v1526 = vld [vmem:[%s1241 + $0x34] sm:$0x1]
        %v1527 = vld [vmem:[%s1241 + $0x38] sm:$0xf]
        %v1528 = vld [vmem:[%s1241 + $0x3c] sm:$0x1]
        %v1530 = vshrl.u32 %v1513, 16
        %v1532 = vrot.slane %v1530, 4
        %v1533 = vshll.u32 %v1513, 16
        %v1535 = vrot.slane %v1533, 5
        %v1536 = vor.u32 %v1532, %v1535
        %v1537 = vrot.slane %v1536, 4
        %v1539 = vshll.u32 %v1514, 16
        %v1541 = vrot.slane %v1539, 5
        %v1542 = vsel %vm487, %v1537, %v1541
        %v1544 = vshrl.u32 %v1515, 16
        %v1546 = vrot.slane %v1544, 4
        %v1547 = vshll.u32 %v1515, 16
        %v1549 = vrot.slane %v1547, 5
        %v1550 = vor.u32 %v1546, %v1549
        %v1551 = vrot.slane %v1550, 4
        %v1553 = vshll.u32 %v1516, 16
        %v1555 = vrot.slane %v1553, 5
        %v1556 = vsel %vm487, %v1551, %v1555
        %v1558 = vshrl.u32 %v1517, 16
        %v1560 = vrot.slane %v1558, 4
        %v1561 = vshll.u32 %v1517, 16
        %v1563 = vrot.slane %v1561, 5
        %v1564 = vor.u32 %v1560, %v1563
        %v1565 = vrot.slane %v1564, 4
        %v1567 = vshll.u32 %v1518, 16
        %v1569 = vrot.slane %v1567, 5
        %v1570 = vsel %vm487, %v1565, %v1569
        %v1572 = vshrl.u32 %v1519, 16
        %v1574 = vrot.slane %v1572, 4
        %v1575 = vshll.u32 %v1519, 16
        %v1577 = vrot.slane %v1575, 5
        %v1578 = vor.u32 %v1574, %v1577
        %v1579 = vrot.slane %v1578, 4
        %v1581 = vshll.u32 %v1520, 16
        %v1583 = vrot.slane %v1581, 5
        %v1584 = vsel %vm487, %v1579, %v1583
        %v1586 = vshrl.u32 %v1521, 16
        %v1588 = vrot.slane %v1586, 4
        %v1589 = vshll.u32 %v1521, 16
        %v1591 = vrot.slane %v1589, 5
        %v1592 = vor.u32 %v1588, %v1591
        %v1593 = vrot.slane %v1592, 4
        %v1595 = vshll.u32 %v1522, 16
        %v1597 = vrot.slane %v1595, 5
        %v1598 = vsel %vm487, %v1593, %v1597
        %v1600 = vshrl.u32 %v1523, 16
        %v1602 = vrot.slane %v1600, 4
        %v1603 = vshll.u32 %v1523, 16
        %v1605 = vrot.slane %v1603, 5
        %v1606 = vor.u32 %v1602, %v1605
        %v1607 = vrot.slane %v1606, 4
        %v1609 = vshll.u32 %v1524, 16
        %v1611 = vrot.slane %v1609, 5
        %v1612 = vsel %vm487, %v1607, %v1611
        %v1614 = vshrl.u32 %v1525, 16
        %v1616 = vrot.slane %v1614, 4
        %v1617 = vshll.u32 %v1525, 16
        %v1619 = vrot.slane %v1617, 5
        %v1620 = vor.u32 %v1616, %v1619
        %v1621 = vrot.slane %v1620, 4
        %v1623 = vshll.u32 %v1526, 16
        %v1625 = vrot.slane %v1623, 5
        %v1626 = vsel %vm487, %v1621, %v1625
        %v1628 = vshrl.u32 %v1527, 16
        %v1630 = vrot.slane %v1628, 4
        %v1631 = vshll.u32 %v1527, 16
        %v1633 = vrot.slane %v1631, 5
        %v1634 = vor.u32 %v1630, %v1633
        %v1635 = vrot.slane %v1634, 4
        %v1637 = vshll.u32 %v1528, 16
        %v1639 = vrot.slane %v1637, 5
        %v1640 = vsel %vm487, %v1635, %v1639
        %v1641 = vld [vmem:[#allocation2] sm:$0xff]
        %v1642 = vld [vmem:[#allocation2 + $0x8] sm:$0xff]
        %v1643 = vld [vmem:[#allocation2 + $0x10] sm:$0xff]
        %v1644 = vld [vmem:[#allocation2 + $0x18] sm:$0xff]
        %v1645 = vld [vmem:[#allocation2 + $0x20] sm:$0xff]
        %v1646 = vld [vmem:[#allocation2 + $0x28] sm:$0xff]
        %v1647 = vld [vmem:[#allocation2 + $0x30] sm:$0xff]
        %v1648 = vld [vmem:[#allocation2 + $0x38] sm:$0xff]
        %s1649 = scalar_lea.vmem %s1, 16
        %v1650 = vld [vmem:[%s1649] sm:$0x3]
        %v1651 = vunpack.c.l.b16 %v1542
        %v1652 = vunpack.c.l.b16 %v1556
        %v1653 = vunpack.c.l.b16 %v1570
        %v1654 = vunpack.c.l.b16 %v1584
        %v1655 = vunpack.c.l.b16 %v1598
        %v1656 = vunpack.c.l.b16 %v1612
        %v1657 = vunpack.c.l.b16 %v1626
        %v1658 = vunpack.c.l.b16 %v1640
        %v1659 = vpack.c.b16 %v1652, %v1651
        %v1660 = vpack.c.b16 %v1654, %v1653
        %v1661 = vpack.c.b16 %v1656, %v1655
        %v1662 = vpack.c.b16 %v1658, %v1657
        %v1664 = vsel %vm234, %v1659, 0
        %v1667 = vsel %vm234, %v1660, 0
        %v1670 = vsel %vm234, %v1661, 0
        %v1673 = vsel %vm234, %v1662, 0
        %v1676 = vsel %vm247, %v1650, 0
        %1678 = vmatprep.subr.bf16.mxu0 0
        %1679 = vmatpush1.bf16.msra.mxu0 %v1676
        %1680 = vmatprep.subr.bf16.mxu0 0
        %1681 = vmatpush1.bf16.msra.mxu0 0
        %1682 = vmatprep.subr.bf16.mxu0 0
        %1683 = vmatpush1.bf16.msra.mxu0 0
        %1684 = vmatprep.subr.bf16.mxu0 0
        %1685 = vmatpush1.bf16.msra.mxu0 0
        %1686 = vmatprep.subr.bf16.mxu0 0
        %1687 = vmatpush1.bf16.msra.mxu0 0
        %1688 = vmatprep.subr.bf16.mxu0 0
        %1689 = vmatpush1.bf16.msra.mxu0 0
        %1690 = vmatprep.subr.bf16.mxu0 0
        %1691 = vmatpush1.bf16.msra.mxu0 0
        %1692 = vmatprep.subr.bf16.mxu0 0
        %1693 = vmatpush1.bf16.msra.mxu0 0
        %1694 = vmatprep.subr.bf16.mxu0 0
        %1695 = vmatpush1.bf16.msra.mxu0 0
        %1696 = vmatprep.subr.bf16.mxu0 0
        %1697 = vmatpush1.bf16.msra.mxu0 0
        %1698 = vmatprep.subr.bf16.mxu0 0
        %1699 = vmatpush1.bf16.msra.mxu0 0
        %1700 = vmatprep.subr.bf16.mxu0 0
        %1701 = vmatpush1.bf16.msra.mxu0 0
        %1702 = vmatprep.subr.bf16.mxu0 0
        %1703 = vmatpush1.bf16.msra.mxu0 0
        %1704 = vmatprep.subr.bf16.mxu0 0
        %1705 = vmatpush1.bf16.msra.mxu0 0
        %1706 = vmatprep.subr.bf16.mxu0 0
        %1707 = vmatpush1.bf16.msra.mxu0 0
        %1708 = vmatprep.subr.bf16.mxu0 0
        %1709 = vmatpush1.bf16.msra.mxu0 0
        %1710 = vmatprep.mubr.bf16.mxu0 0
        %1711 = vmatmul.mubr.bf16.gmra.mrb[0].mxu0 %v1664
        %v1712 = vpop.f32.mrb[0].mxu0
        %v1713 = vadd.f32 0.0, %v1712
        %v1714 = vpop.f32.mrb[0].mxu0
        %v1715 = vpop.f32.mrb[0].mxu0
        %v1716 = vadd.f32 0.0, %v1715
        %v1717 = vpop.f32.mrb[0].mxu0
        %1718 = vmatprep.mubr.bf16.mxu0 0
        %1719 = vmatmul.mubr.bf16.gmra.mrb[0].mxu0 %v1667
        %v1720 = vpop.f32.mrb[0].mxu0
        %v1721 = vadd.f32 0.0, %v1720
        %v1722 = vpop.f32.mrb[0].mxu0
        %v1723 = vpop.f32.mrb[0].mxu0
        %v1724 = vadd.f32 0.0, %v1723
        %v1725 = vpop.f32.mrb[0].mxu0
        %1726 = vmatprep.mubr.bf16.mxu0 0
        %1727 = vmatmul.mubr.bf16.gmra.mrb[0].mxu0 %v1670
        %v1728 = vpop.f32.mrb[0].mxu0
        %v1729 = vadd.f32 0.0, %v1728
        %v1730 = vpop.f32.mrb[0].mxu0
        %v1731 = vpop.f32.mrb[0].mxu0
        %v1732 = vadd.f32 0.0, %v1731
        %v1733 = vpop.f32.mrb[0].mxu0
        %1734 = vmatprep.mubr.bf16.mxu0 0
        %1735 = vmatmul.mubr.bf16.gmra.mrb[0].mxu0 %v1673
        %v1736 = vpop.f32.mrb[0].mxu0
        %v1737 = vadd.f32 0.0, %v1736
        %v1738 = vpop.f32.mrb[0].mxu0
        %v1739 = vpop.f32.mrb[0].mxu0
        %v1740 = vadd.f32 0.0, %v1739
        %v1741 = vpop.f32.mrb[0].mxu0
        %1742 = vdwg.mxu0
        %v1743 = vadd.f32 %v1641, %v1713
        %v1744 = vadd.f32 %v1642, %v1716
        %v1745 = vadd.f32 %v1643, %v1721
        %v1746 = vadd.f32 %v1644, %v1724
        %v1747 = vadd.f32 %v1645, %v1729
        %v1748 = vadd.f32 %v1646, %v1732
        %v1749 = vadd.f32 %v1647, %v1737
        %v1750 = vadd.f32 %v1648, %v1740
        %1751 = vst [vmem:[#allocation2] sm:$0xff] %v1743
        %1752 = vst [vmem:[#allocation2 + $0x8] sm:$0xff] %v1744
        %1753 = vst [vmem:[#allocation2 + $0x10] sm:$0xff] %v1745
        %1754 = vst [vmem:[#allocation2 + $0x18] sm:$0xff] %v1746
        %1755 = vst [vmem:[#allocation2 + $0x20] sm:$0xff] %v1747
        %1756 = vst [vmem:[#allocation2 + $0x28] sm:$0xff] %v1748
        %1757 = vst [vmem:[#allocation2 + $0x30] sm:$0xff] %v1749
        %1758 = vst [vmem:[#allocation2 + $0x38] sm:$0xff] %v1750
        %v1759 = vld [vmem:[#allocation2] sm:$0xff]
        %v1760 = vld [vmem:[#allocation2 + $0x8] sm:$0xff]
        %v1761 = vld [vmem:[#allocation2 + $0x10] sm:$0xff]
        %v1762 = vld [vmem:[#allocation2 + $0x18] sm:$0xff]
        %v1763 = vld [vmem:[#allocation2 + $0x20] sm:$0xff]
        %v1764 = vld [vmem:[#allocation2 + $0x28] sm:$0xff]
        %v1765 = vld [vmem:[#allocation2 + $0x30] sm:$0xff]
        %v1766 = vld [vmem:[#allocation2 + $0x38] sm:$0xff]
        %v1767 = vld [vmem:[%s2] sm:$0x1]
        %v1769 = vlaneseq
        %v1770 = vshrl.u32 %v1769, 7
        %v1771 = vsub.s32 0, %v1770
        %v1772 = vrot.slane %v1767, %v1771
        %v1774 = vadd.f32 %v1759, %v1772
        %v1775 = vadd.f32 %v1760, %v1772
        %v1776 = vadd.f32 %v1761, %v1772
        %v1777 = vadd.f32 %v1762, %v1772
        %v1778 = vadd.f32 %v1763, %v1772
        %v1779 = vadd.f32 %v1764, %v1772
        %v1780 = vadd.f32 %v1765, %v1772
        %v1781 = vadd.f32 %v1766, %v1772
        %1782 = vst [vmem:[%s177] sm:$0xff] %v1774
        %1783 = vst [vmem:[%s177 + $0x8] sm:$0xff] %v1775
        %1784 = vst [vmem:[%s177 + $0x10] sm:$0xff] %v1776
        %1785 = vst [vmem:[%s177 + $0x18] sm:$0xff] %v1777
        %1786 = vst [vmem:[%s177 + $0x20] sm:$0xff] %v1778
        %1787 = vst [vmem:[%s177 + $0x28] sm:$0xff] %v1779
        %1788 = vst [vmem:[%s177 + $0x30] sm:$0xff] %v1780
        %1789 = vst [vmem:[%s177 + $0x38] sm:$0xff] %v1781
        %s1790 = sand.u32 %s107, 1
        %s1791 = scalar_lea.sflag [#allocation4], %s1790
        %s1792 = sand.u32 %s107, 1
        %s1793 = smul.addr %s1792, 64
        %s1794 = scalar_lea.vmem [#allocation3], %s1793
        // Predicated region
        $region33: #{tpu_custom_call.1} parent=31 // pred_check
          %p1795 = pneg %p117
        $region34: #{tpu_custom_call.1} parent=31 // pred_check_branch
          %1797 = sbr.rel (%p1795) target = $region36
        $region35: #{tpu_custom_call.1} parent=31 // pred_region
          %s1798 = smul.u32 8, %s22
          %s1800 = ssub.s32 1024, 1024
          %1801 = vsyncadd %s1791, %s1800
          %s1802 = smul.addr %s21, 8
          %s1803 = sadd.s32 %s1798, %s1802
          %s1804 = smul.addr %s1803, 128
          %s1805 = scalar_lea.hbm %s3, %s1804
          %s1806 = sshll.u32 %s1794, 4
          %s1807 = int_to_ptr.vmem [resolvable:$true] %s1806
          %1812 = dma.vmem_to_hbm [thread:$0]  %s1807, 1024, %s1805, %s1791, 128, 128, 8
        $region36: #{tpu_custom_call.1} parent=31 // pred_fallthru
          _
      $region32: #{tpu_custom_call.1} parent=5 // pred_fallthru
        _
      %p1813 = scmp.le.s32.totalorder 2, %s12
      // Predicated region
      $region37: #{tpu_custom_call.1} parent=5 // pred_check
        %p1814 = pneg %p1813
      $region38: #{tpu_custom_call.1} parent=5 // pred_check_branch
        %1816 = sbr.rel (%p1814) target = $region40
      $region39: #{tpu_custom_call.1} parent=5 // pred_region
        %s1817 = ssub.s32 %s12, 2
        // Predicated region
        $region41: #{tpu_custom_call.1} parent=39 // pred_check
          %p1818 = pneg %p123
        $region42: #{tpu_custom_call.1} parent=39 // pred_check_branch
          %1820 = sbr.rel (%p1818) target = $region44
        $region43: #{tpu_custom_call.1} parent=39 // pred_region
          %s1821 = sand.u32 %s108, 1
          %s1822 = scalar_lea.sflag [#allocation4], %s1821
          %s1823 = sand.u32 %s108, 1
          %s1824 = smul.addr %s1823, 64
          %s1825 = scalar_lea.vmem [#allocation3], %s1824
          %1826 = dma.done %s1822, 1024
        $region44: #{tpu_custom_call.1} parent=39 // pred_fallthru
          _
      $region40: #{tpu_custom_call.1} parent=5 // pred_fallthru
        _
    $region6: #{tpu_custom_call.1} parent=1 // loop_footer
      %s16 = sadd.s32 1, %s12
    $region7: #{tpu_custom_call.1} parent=1 // loop_footer_branch
      %11 = sbr.rel target = $region3
    $region8: #{tpu_custom_call.1} parent=1 // loop_exit
      _
    %1827 = vsyncpa [#allocation4], 1
    %s1828 = scalar_lea.sflag [#allocation4], 1
    %1829 = vsyncpa %s1828, 1

</llo_original>
